<compile_context>
chip_gen: v5e
topology: v5e:2x2
jax: 0.10.0
libtpu: 0.0.40
codegen_flags: <defaults>
</compile_context>

<pallas_src>
import jax
import jax.numpy as jnp
from jax.experimental import pallas as pl
from jax.experimental.pallas import tpu as pltpu


def _vmem_specs(n):
    return [pl.BlockSpec(memory_space=pltpu.MemorySpace.VMEM) for _ in range(n)]


# ----------------------- fused Pallas kernel (hot path) -----------------------

def _gae_fused_kernel(x_ref, adj_ref, pool_ref, adjup_ref,
                      we_ref, be_ref,
                      wae_e_ref, bae_e_ref, wae_d_ref, bae_d_ref,
                      wd_ref, bd_ref, wskip_ref, bskip_ref,
                      out_ref, lat_ref, dec_s):
    f32, bf16 = jnp.float32, jnp.bfloat16

    x_bf = x_ref[...]                                           # [B*N, F_in] bf16

    # ---- Encoder GCN: relu(adj @ (x @ W_enc) + b_enc) ----
    xw = jnp.dot(x_bf, we_ref[...], preferred_element_type=f32)              # [B*N, H]
    enc = jnp.maximum(
        jnp.dot(adj_ref[...], xw.astype(bf16), preferred_element_type=f32)
        + be_ref[...], 0.0)                                                   # [B*N, H] f32

    # ---- mean-pool onto clusters (pool-major row order q = p*B + b) ----
    pooled = jnp.dot(pool_ref[...], enc.astype(bf16),
                     preferred_element_type=f32)                              # [Np*B, H] f32

    # ---- Autoencoder encoder: latent = tanh(flatten(pooled) @ W_e + b_e),
    #      computed as a sum of per-cluster [B,H]@[H,L] contractions so no
    #      layout-crossing flatten is needed. ----
    we3 = wae_e_ref[...]                                                      # [Np, H, L] bf16
    n_pool = we3.shape[0]
    b_graphs, lat_dim = lat_ref.shape
    z = jnp.zeros((b_graphs, lat_dim), f32)
    for p in range(n_pool):                                                   # static unroll
        blk = pooled[p * b_graphs:(p + 1) * b_graphs, :]                      # [B, H]
        z = z + jnp.dot(blk.astype(bf16), we3[p], preferred_element_type=f32)
    latent = jnp.tanh(z + bae_e_ref[...])                                     # [B, L] f32
    lat_ref[...] = latent

    # ---- Autoencoder decoder: per-cluster decoded pooled features ----
    wd3 = wae_d_ref[...]                                                      # [Np, L, H] bf16
    bd2 = bae_d_ref[...]                                                      # [Np, H] f32
    lat_bf = latent.astype(bf16)
    for p in range(n_pool):                                                   # static unroll
        dec_s[p * b_graphs:(p + 1) * b_graphs, :] = (
            jnp.dot(lat_bf, wd3[p], preferred_element_type=f32) + bd2[p:p + 1, :])

    # ---- Decoder GCN on unpooled features; unpool is folded into adj_up ----
    dw = jnp.dot(dec_s[...].astype(bf16), wd_ref[...],
                 preferred_element_type=f32)                                  # [Np*B, Fo]
    xdec = jnp.maximum(
        jnp.dot(adjup_ref[...], dw.astype(bf16), preferred_element_type=f32)
        + bd_ref[...], 0.0)                                                   # [B*N, Fo]

    # ---- skip residual: out = xdec + x @ (0.1*W_skip) + 0.1*b_skip ----
    out_ref[...] = (xdec
                    + jnp.dot(x_bf, wskip_ref[...], preferred_element_type=f32)
                    + bskip_ref[...])


def gae_forward_fused(x_bf, adj_bd, pool_mat, adj_up, kp,
                      b, n_pooled, hidden, f_out, latent_dim):
    bn = x_bf.shape[0]
    bnp = b * n_pooled
    return pl.pallas_call(
        _gae_fused_kernel,
        out_shape=(jax.ShapeDtypeStruct((bn, f_out), jnp.float32),
                   jax.ShapeDtypeStruct((b, latent_dim), jnp.float32)),
        in_specs=_vmem_specs(14),
        out_specs=(pl.BlockSpec(memory_space=pltpu.MemorySpace.VMEM),
                   pl.BlockSpec(memory_space=pltpu.MemorySpace.VMEM)),
        scratch_shapes=[pltpu.VMEM((bnp, hidden), jnp.float32)],
    )(x_bf, adj_bd, pool_mat, adj_up,
      kp["w_enc"], kp["b_enc"],
      kp["w_ae_e3"], kp["b_ae_e"],
      kp["w_ae_d3"], kp["b_ae_d2"],
      kp["w_dec"], kp["b_dec"],
      kp["w_skip_s"], kp["b_skip_s"])


# ------------------------------- host-side setup -------------------------------

def make_graph(n_nodes):
    """Ring graph + self loops, GCN-normalized dense adjacency (f32)."""
    a = jnp.zeros((n_nodes, n_nodes), jnp.float32)
    idx = jnp.arange(n_nodes)
    a = a.at[idx, (idx + 1) % n_nodes].set(1.0)
    a = a.at[(idx + 1) % n_nodes, idx].set(1.0)
    a = a + jnp.eye(n_nodes, dtype=jnp.float32)
    deg = a.sum(axis=1)
    dinv = 1.0 / jnp.sqrt(deg)
    return a * dinv[:, None] * dinv[None, :]


def build_operators(adj_norm, b, n, n_pooled):
    """Precompute bf16 operator matrices for the fused kernel:
       block-diagonal adjacency, pool-major mean-pool matrix, and
       adj_unpool = adj_bd @ U (unpool folded into the adjacency)."""
    ratio = n // n_pooled
    bn, bnp = b * n, b * n_pooled
    adj_bd = jnp.kron(jnp.eye(b, dtype=jnp.float32), adj_norm)          # [BN, BN]

    r = jnp.arange(bn)
    b_idx, node = r // n, r % n
    pm_row = (node // ratio) * b + b_idx                                # pool-major index
    unpool = jax.nn.one_hot(pm_row, bnp, dtype=jnp.float32)             # [BN, BNp]
    pool_assign = unpool.T                                              # [BNp, BN]
    pool_mat = pool_assign / pool_assign.sum(axis=1, keepdims=True)     # mean pool
    adj_up = adj_bd @ unpool                                            # [BN, BNp]

    bf = jnp.bfloat16
    return adj_bd.astype(bf), pool_mat.astype(bf), adj_up.astype(bf)


def init_params(key, f_in, hidden, f_out, n_pooled, latent_dim):
    ks = jax.random.split(key, 6)
    ae_in = n_pooled * hidden
    return {
        "w_enc": jax.random.normal(ks[0], (f_in, hidden), jnp.float32) * 0.1,
        "b_enc": jnp.zeros((1, hidden), jnp.float32),
        "w_ae_e": jax.random.normal(ks[1], (ae_in, latent_dim), jnp.float32) * 0.05,
        "b_ae_e": jnp.zeros((1, latent_dim), jnp.float32),
        "w_ae_d": jax.random.normal(ks[2], (latent_dim, ae_in), jnp.float32) * 0.05,
        "b_ae_d": jnp.zeros((1, ae_in), jnp.float32),
        "w_dec": jax.random.normal(ks[3], (hidden, f_out), jnp.float32) * 0.1,
        "b_dec": jnp.zeros((1, f_out), jnp.float32),
        "w_skip": jax.random.normal(ks[4], (f_in, f_out), jnp.float32) * 0.1,
        "b_skip": jax.random.normal(ks[5], (1, f_out), jnp.float32) * 0.01,
    }


def prepare_kernel_params(params, n_pooled, hidden, latent_dim):
    """bf16 matmul operands; AE weights pre-reshaped to per-cluster blocks
    (row-major consistent with the [Np*H] flatten); 0.1 skip scale folded in."""
    bf = jnp.bfloat16
    return {
        "w_enc": params["w_enc"].astype(bf),
        "b_enc": params["b_enc"],
        "w_ae_e3": params["w_ae_e"].reshape(n_pooled, hidden, latent_dim).astype(bf),
        "b_ae_e": params["b_ae_e"],
        "w_ae_d3": params["w_ae_d"].reshape(latent_dim, n_pooled, hidden)
                                    .transpose(1, 0, 2).astype(bf),
        "b_ae_d2": params["b_ae_d"].reshape(n_pooled, hidden),
        "w_dec": params["w_dec"].astype(bf),
        "b_dec": params["b_dec"],
        "w_skip_s": (0.1 * params["w_skip"]).astype(bf),
        "b_skip_s": 0.1 * params["b_skip"],
    }


# ------------------------------ pure-JAX reference ------------------------------

def reference_forward(x, adj, params, n_pooled):
    """Mirrors the original GAE.forward per graph (encode -> pool -> AE ->
    unpool -> decode -> +0.1*skip), with bf16 matmul operands / f32 accumulation
    to match the kernel's numerics."""
    bf, f32 = jnp.bfloat16, jnp.float32
    b, n, _ = x.shape
    ratio = n // n_pooled
    adj_bf = adj.astype(bf)

    def mm(a, w):
        return jnp.dot(a.astype(bf), w.astype(bf), preferred_element_type=f32)

    def one_graph(xg):
        xw = mm(xg, params["w_enc"])
        enc = jnp.maximum(jnp.dot(adj_bf, xw.astype(bf), preferred_element_type=f32)
                          + params["b_enc"], 0.0)
        pooled = enc.astype(bf).astype(f32).reshape(n_pooled, ratio, -1).mean(axis=1)
        flat = pooled.reshape(1, -1)
        latent = jnp.tanh(mm(flat, params["w_ae_e"]) + params["b_ae_e"])
        dec = (mm(latent, params["w_ae_d"]) + params["b_ae_d"]).reshape(n_pooled, -1)
        up = jnp.repeat(dec, ratio, axis=0)
        dw = mm(up, params["w_dec"])
        xdec = jnp.maximum(jnp.dot(adj_bf, dw.astype(bf), preferred_element_type=f32)
                           + params["b_dec"], 0.0)
        out = xdec + 0.1 * (mm(xg, params["w_skip"]) + params["b_skip"])
        return out, latent[0]

    outs, lats = jax.vmap(one_graph)(x)
    return outs.reshape(b * n, -1), lats


# ------------------------------------ main ------------------------------------

if __name__ == "__main__":
    B, N, F_IN, HIDDEN, F_OUT = 8, 16, 8, 32, 16
    N_POOLED, LATENT = 8, 16
    assert N % N_POOLED == 0

    key = jax.random.PRNGKey(0)
    k_x, k_p = jax.random.split(key)

    x = jax.random.normal(k_x, (B, N, F_IN), jnp.float32)        # batch of graphs
    adj_norm = make_graph(N)
    params = init_params(k_p, F_IN, HIDDEN, F_OUT, N_POOLED, LATENT)

    adj_bd, pool_mat, adj_up = build_operators(adj_norm, B, N, N_POOLED)
    kp = prepare_kernel_params(params, N_POOLED, HIDDEN, LATENT)
    x_stacked_bf = x.reshape(B * N, F_IN).astype(jnp.bfloat16)

    x_out, latent = gae_forward_fused(x_stacked_bf, adj_bd, pool_mat, adj_up, kp,
                                      B, N_POOLED, HIDDEN, F_OUT, LATENT)
    jax.block_until_ready((x_out, latent))

    assert x_out.shape == (B * N, F_OUT) and x_out.dtype == jnp.float32
    assert latent.shape == (B, LATENT) and latent.dtype == jnp.float32
    assert bool(jnp.all(jnp.isfinite(x_out))) and bool(jnp.all(jnp.isfinite(latent)))

    ref_out, ref_lat = reference_forward(x, adj_norm, params, N_POOLED)
    err_x = float(jnp.max(jnp.abs(x_out - ref_out)))
    err_l = float(jnp.max(jnp.abs(latent - ref_lat)))
    assert err_x < 2e-2 and err_l < 2e-2, (err_x, err_l)

    print("KERNEL_OK")
</pallas_src>

<mosaic_0001>
module attributes {stable_mosaic.version = 11 : i64} {
  func.func @_gae_fused_kernel(%arg0: memref<128x8xbf16, #tpu.memory_space<vmem>>, %arg1: memref<128x128xbf16, #tpu.memory_space<vmem>>, %arg2: memref<64x128xbf16, #tpu.memory_space<vmem>>, %arg3: memref<128x64xbf16, #tpu.memory_space<vmem>>, %arg4: memref<8x32xbf16, #tpu.memory_space<vmem>>, %arg5: memref<1x32xf32, #tpu.memory_space<vmem>>, %arg6: memref<8x32x16xbf16, #tpu.memory_space<vmem>>, %arg7: memref<1x16xf32, #tpu.memory_space<vmem>>, %arg8: memref<8x16x32xbf16, #tpu.memory_space<vmem>>, %arg9: memref<8x32xf32, #tpu.memory_space<vmem>>, %arg10: memref<32x16xbf16, #tpu.memory_space<vmem>>, %arg11: memref<1x16xf32, #tpu.memory_space<vmem>>, %arg12: memref<8x16xbf16, #tpu.memory_space<vmem>>, %arg13: memref<1x16xf32, #tpu.memory_space<vmem>>, %arg14: memref<128x16xf32, #tpu.memory_space<vmem>>, %arg15: memref<8x16xf32, #tpu.memory_space<vmem>>, %arg16: memref<64x32xf32, #tpu.memory_space<vmem>>) attributes {dimension_semantics = [], scalar_prefetch = 0 : i64, scratch_operands = 1 : i64, tpu.core_type = #tpu.core_type<tc>} {
    %c0 = arith.constant 0 : index
    %c0_0 = arith.constant 0 : index
    %0 = vector.load %arg0[%c0, %c0_0] : memref<128x8xbf16, #tpu.memory_space<vmem>>, vector<128x8xbf16>
    %c0_1 = arith.constant 0 : index
    %c0_2 = arith.constant 0 : index
    %1 = vector.load %arg4[%c0_1, %c0_2] : memref<8x32xbf16, #tpu.memory_space<vmem>>, vector<8x32xbf16>
    %cst = arith.constant dense<0.000000e+00> : vector<128x32xf32>
    %2 = tpu.matmul %0, %1, %cst {dimension_numbers = #tpu.dot_dimension_numbers<[1], [0], [0], [1], [0, 0, 1, 1], [], []>} : vector<128x8xbf16>, vector<8x32xbf16>, vector<128x32xf32> -> vector<128x32xf32>
    %c0_3 = arith.constant 0 : index
    %c0_4 = arith.constant 0 : index
    %3 = vector.load %arg1[%c0_3, %c0_4] : memref<128x128xbf16, #tpu.memory_space<vmem>>, vector<128x128xbf16>
    %4 = arith.truncf %2 : vector<128x32xf32> to vector<128x32xbf16>
    %cst_5 = arith.constant dense<0.000000e+00> : vector<128x32xf32>
    %5 = tpu.matmul %3, %4, %cst_5 {dimension_numbers = #tpu.dot_dimension_numbers<[1], [0], [0], [1], [0, 0, 1, 1], [], []>} : vector<128x128xbf16>, vector<128x32xbf16>, vector<128x32xf32> -> vector<128x32xf32>
    %c0_6 = arith.constant 0 : index
    %c0_7 = arith.constant 0 : index
    %6 = vector.load %arg5[%c0_6, %c0_7] : memref<1x32xf32, #tpu.memory_space<vmem>>, vector<1x32xf32>
    %7 = vector.broadcast %6 : vector<1x32xf32> to vector<128x32xf32>
    %8 = arith.addf %5, %7 : vector<128x32xf32>
    %cst_8 = arith.constant 0.000000e+00 : f32
    %9 = vector.broadcast %cst_8 : f32 to vector<128x32xf32>
    %10 = arith.maximumf %8, %9 : vector<128x32xf32>
    %c0_9 = arith.constant 0 : index
    %c0_10 = arith.constant 0 : index
    %11 = vector.load %arg2[%c0_9, %c0_10] : memref<64x128xbf16, #tpu.memory_space<vmem>>, vector<64x128xbf16>
    %12 = arith.truncf %10 : vector<128x32xf32> to vector<128x32xbf16>
    %cst_11 = arith.constant dense<0.000000e+00> : vector<64x32xf32>
    %13 = tpu.matmul %11, %12, %cst_11 {dimension_numbers = #tpu.dot_dimension_numbers<[1], [0], [0], [1], [0, 0, 1, 1], [], []>} : vector<64x128xbf16>, vector<128x32xbf16>, vector<64x32xf32> -> vector<64x32xf32>
    %c0_12 = arith.constant 0 : index
    %c0_13 = arith.constant 0 : index
    %c0_14 = arith.constant 0 : index
    %14 = vector.load %arg6[%c0_12, %c0_13, %c0_14] : memref<8x32x16xbf16, #tpu.memory_space<vmem>>, vector<8x32x16xbf16>
    %cst_15 = arith.constant 0.000000e+00 : f32
    %15 = vector.broadcast %cst_15 : f32 to vector<8x16xf32>
    %16 = vector.extract_strided_slice %13 {offsets = [0, 0], sizes = [8, 32], strides = [1, 1]} : vector<64x32xf32> to vector<8x32xf32>
    %17 = arith.truncf %16 : vector<8x32xf32> to vector<8x32xbf16>
    %18 = vector.extract_strided_slice %14 {offsets = [0, 0, 0], sizes = [1, 32, 16], strides = [1, 1, 1]} : vector<8x32x16xbf16> to vector<1x32x16xbf16>
    %19 = vector.shape_cast %18 : vector<1x32x16xbf16> to vector<32x16xbf16>
    %cst_16 = arith.constant dense<0.000000e+00> : vector<8x16xf32>
    %20 = tpu.matmul %17, %19, %cst_16 {dimension_numbers = #tpu.dot_dimension_numbers<[1], [0], [0], [1], [0, 0, 1, 1], [], []>} : vector<8x32xbf16>, vector<32x16xbf16>, vector<8x16xf32> -> vector<8x16xf32>
    %21 = arith.addf %15, %20 : vector<8x16xf32>
    %22 = vector.extract_strided_slice %13 {offsets = [8, 0], sizes = [8, 32], strides = [1, 1]} : vector<64x32xf32> to vector<8x32xf32>
    %23 = arith.truncf %22 : vector<8x32xf32> to vector<8x32xbf16>
    %24 = vector.extract_strided_slice %14 {offsets = [1, 0, 0], sizes = [1, 32, 16], strides = [1, 1, 1]} : vector<8x32x16xbf16> to vector<1x32x16xbf16>
    %25 = vector.shape_cast %24 : vector<1x32x16xbf16> to vector<32x16xbf16>
    %cst_17 = arith.constant dense<0.000000e+00> : vector<8x16xf32>
    %26 = tpu.matmul %23, %25, %cst_17 {dimension_numbers = #tpu.dot_dimension_numbers<[1], [0], [0], [1], [0, 0, 1, 1], [], []>} : vector<8x32xbf16>, vector<32x16xbf16>, vector<8x16xf32> -> vector<8x16xf32>
    %27 = arith.addf %21, %26 : vector<8x16xf32>
    %28 = vector.extract_strided_slice %13 {offsets = [16, 0], sizes = [8, 32], strides = [1, 1]} : vector<64x32xf32> to vector<8x32xf32>
    %29 = arith.truncf %28 : vector<8x32xf32> to vector<8x32xbf16>
    %30 = vector.extract_strided_slice %14 {offsets = [2, 0, 0], sizes = [1, 32, 16], strides = [1, 1, 1]} : vector<8x32x16xbf16> to vector<1x32x16xbf16>
    %31 = vector.shape_cast %30 : vector<1x32x16xbf16> to vector<32x16xbf16>
    %cst_18 = arith.constant dense<0.000000e+00> : vector<8x16xf32>
    %32 = tpu.matmul %29, %31, %cst_18 {dimension_numbers = #tpu.dot_dimension_numbers<[1], [0], [0], [1], [0, 0, 1, 1], [], []>} : vector<8x32xbf16>, vector<32x16xbf16>, vector<8x16xf32> -> vector<8x16xf32>
    %33 = arith.addf %27, %32 : vector<8x16xf32>
    %34 = vector.extract_strided_slice %13 {offsets = [24, 0], sizes = [8, 32], strides = [1, 1]} : vector<64x32xf32> to vector<8x32xf32>
    %35 = arith.truncf %34 : vector<8x32xf32> to vector<8x32xbf16>
    %36 = vector.extract_strided_slice %14 {offsets = [3, 0, 0], sizes = [1, 32, 16], strides = [1, 1, 1]} : vector<8x32x16xbf16> to vector<1x32x16xbf16>
    %37 = vector.shape_cast %36 : vector<1x32x16xbf16> to vector<32x16xbf16>
    %cst_19 = arith.constant dense<0.000000e+00> : vector<8x16xf32>
    %38 = tpu.matmul %35, %37, %cst_19 {dimension_numbers = #tpu.dot_dimension_numbers<[1], [0], [0], [1], [0, 0, 1, 1], [], []>} : vector<8x32xbf16>, vector<32x16xbf16>, vector<8x16xf32> -> vector<8x16xf32>
    %39 = arith.addf %33, %38 : vector<8x16xf32>
    %40 = vector.extract_strided_slice %13 {offsets = [32, 0], sizes = [8, 32], strides = [1, 1]} : vector<64x32xf32> to vector<8x32xf32>
    %41 = arith.truncf %40 : vector<8x32xf32> to vector<8x32xbf16>
    %42 = vector.extract_strided_slice %14 {offsets = [4, 0, 0], sizes = [1, 32, 16], strides = [1, 1, 1]} : vector<8x32x16xbf16> to vector<1x32x16xbf16>
    %43 = vector.shape_cast %42 : vector<1x32x16xbf16> to vector<32x16xbf16>
    %cst_20 = arith.constant dense<0.000000e+00> : vector<8x16xf32>
    %44 = tpu.matmul %41, %43, %cst_20 {dimension_numbers = #tpu.dot_dimension_numbers<[1], [0], [0], [1], [0, 0, 1, 1], [], []>} : vector<8x32xbf16>, vector<32x16xbf16>, vector<8x16xf32> -> vector<8x16xf32>
    %45 = arith.addf %39, %44 : vector<8x16xf32>
    %46 = vector.extract_strided_slice %13 {offsets = [40, 0], sizes = [8, 32], strides = [1, 1]} : vector<64x32xf32> to vector<8x32xf32>
    %47 = arith.truncf %46 : vector<8x32xf32> to vector<8x32xbf16>
    %48 = vector.extract_strided_slice %14 {offsets = [5, 0, 0], sizes = [1, 32, 16], strides = [1, 1, 1]} : vector<8x32x16xbf16> to vector<1x32x16xbf16>
    %49 = vector.shape_cast %48 : vector<1x32x16xbf16> to vector<32x16xbf16>
    %cst_21 = arith.constant dense<0.000000e+00> : vector<8x16xf32>
    %50 = tpu.matmul %47, %49, %cst_21 {dimension_numbers = #tpu.dot_dimension_numbers<[1], [0], [0], [1], [0, 0, 1, 1], [], []>} : vector<8x32xbf16>, vector<32x16xbf16>, vector<8x16xf32> -> vector<8x16xf32>
    %51 = arith.addf %45, %50 : vector<8x16xf32>
    %52 = vector.extract_strided_slice %13 {offsets = [48, 0], sizes = [8, 32], strides = [1, 1]} : vector<64x32xf32> to vector<8x32xf32>
    %53 = arith.truncf %52 : vector<8x32xf32> to vector<8x32xbf16>
    %54 = vector.extract_strided_slice %14 {offsets = [6, 0, 0], sizes = [1, 32, 16], strides = [1, 1, 1]} : vector<8x32x16xbf16> to vector<1x32x16xbf16>
    %55 = vector.shape_cast %54 : vector<1x32x16xbf16> to vector<32x16xbf16>
    %cst_22 = arith.constant dense<0.000000e+00> : vector<8x16xf32>
    %56 = tpu.matmul %53, %55, %cst_22 {dimension_numbers = #tpu.dot_dimension_numbers<[1], [0], [0], [1], [0, 0, 1, 1], [], []>} : vector<8x32xbf16>, vector<32x16xbf16>, vector<8x16xf32> -> vector<8x16xf32>
    %57 = arith.addf %51, %56 : vector<8x16xf32>
    %58 = vector.extract_strided_slice %13 {offsets = [56, 0], sizes = [8, 32], strides = [1, 1]} : vector<64x32xf32> to vector<8x32xf32>
    %59 = arith.truncf %58 : vector<8x32xf32> to vector<8x32xbf16>
    %60 = vector.extract_strided_slice %14 {offsets = [7, 0, 0], sizes = [1, 32, 16], strides = [1, 1, 1]} : vector<8x32x16xbf16> to vector<1x32x16xbf16>
    %61 = vector.shape_cast %60 : vector<1x32x16xbf16> to vector<32x16xbf16>
    %cst_23 = arith.constant dense<0.000000e+00> : vector<8x16xf32>
    %62 = tpu.matmul %59, %61, %cst_23 {dimension_numbers = #tpu.dot_dimension_numbers<[1], [0], [0], [1], [0, 0, 1, 1], [], []>} : vector<8x32xbf16>, vector<32x16xbf16>, vector<8x16xf32> -> vector<8x16xf32>
    %63 = arith.addf %57, %62 : vector<8x16xf32>
    %c0_24 = arith.constant 0 : index
    %c0_25 = arith.constant 0 : index
    %64 = vector.load %arg7[%c0_24, %c0_25] : memref<1x16xf32, #tpu.memory_space<vmem>>, vector<1x16xf32>
    %65 = vector.broadcast %64 : vector<1x16xf32> to vector<8x16xf32>
    %66 = arith.addf %63, %65 : vector<8x16xf32>
    %67 = math.tanh %66 : vector<8x16xf32>
    %c0_26 = arith.constant 0 : index
    %c0_27 = arith.constant 0 : index
    %68 = vector.load %arg15[%c0_26, %c0_27] : memref<8x16xf32, #tpu.memory_space<vmem>>, vector<8x16xf32>
    tpu.vector_store %arg15[%c0_26, %c0_27], %67 {strides = array<i32>} : memref<8x16xf32, #tpu.memory_space<vmem>>, vector<8x16xf32>,
    %c0_28 = arith.constant 0 : index
    %c0_29 = arith.constant 0 : index
    %c0_30 = arith.constant 0 : index
    %69 = vector.load %arg8[%c0_28, %c0_29, %c0_30] : memref<8x16x32xbf16, #tpu.memory_space<vmem>>, vector<8x16x32xbf16>
    %c0_31 = arith.constant 0 : index
    %c0_32 = arith.constant 0 : index
    %70 = vector.load %arg9[%c0_31, %c0_32] : memref<8x32xf32, #tpu.memory_space<vmem>>, vector<8x32xf32>
    %71 = arith.truncf %67 : vector<8x16xf32> to vector<8x16xbf16>
    %72 = vector.extract_strided_slice %69 {offsets = [0, 0, 0], sizes = [1, 16, 32], strides = [1, 1, 1]} : vector<8x16x32xbf16> to vector<1x16x32xbf16>
    %73 = vector.shape_cast %72 : vector<1x16x32xbf16> to vector<16x32xbf16>
    %cst_33 = arith.constant dense<0.000000e+00> : vector<8x32xf32>
    %74 = tpu.matmul %71, %73, %cst_33 {dimension_numbers = #tpu.dot_dimension_numbers<[1], [0], [0], [1], [0, 0, 1, 1], [], []>} : vector<8x16xbf16>, vector<16x32xbf16>, vector<8x32xf32> -> vector<8x32xf32>
    %75 = vector.extract_strided_slice %70 {offsets = [0, 0], sizes = [1, 32], strides = [1, 1]} : vector<8x32xf32> to vector<1x32xf32>
    %76 = vector.broadcast %75 : vector<1x32xf32> to vector<8x32xf32>
    %77 = arith.addf %74, %76 : vector<8x32xf32>
    %c0_34 = arith.constant 0 : index
    %c0_35 = arith.constant 0 : index
    %78 = vector.load %arg16[%c0_34, %c0_35] : memref<64x32xf32, #tpu.memory_space<vmem>>, vector<8x32xf32>
    tpu.vector_store %arg16[%c0_34, %c0_35], %77 {strides = array<i32>} : memref<64x32xf32, #tpu.memory_space<vmem>>, vector<8x32xf32>,
    %79 = vector.extract_strided_slice %69 {offsets = [1, 0, 0], sizes = [1, 16, 32], strides = [1, 1, 1]} : vector<8x16x32xbf16> to vector<1x16x32xbf16>
    %80 = vector.shape_cast %79 : vector<1x16x32xbf16> to vector<16x32xbf16>
    %cst_36 = arith.constant dense<0.000000e+00> : vector<8x32xf32>
    %81 = tpu.matmul %71, %80, %cst_36 {dimension_numbers = #tpu.dot_dimension_numbers<[1], [0], [0], [1], [0, 0, 1, 1], [], []>} : vector<8x16xbf16>, vector<16x32xbf16>, vector<8x32xf32> -> vector<8x32xf32>
    %82 = vector.extract_strided_slice %70 {offsets = [1, 0], sizes = [1, 32], strides = [1, 1]} : vector<8x32xf32> to vector<1x32xf32>
    %83 = vector.broadcast %82 : vector<1x32xf32> to vector<8x32xf32>
    %84 = arith.addf %81, %83 : vector<8x32xf32>
    %c8 = arith.constant 8 : index
    %c0_37 = arith.constant 0 : index
    %85 = vector.load %arg16[%c8, %c0_37] : memref<64x32xf32, #tpu.memory_space<vmem>>, vector<8x32xf32>
    tpu.vector_store %arg16[%c8, %c0_37], %84 {strides = array<i32>} : memref<64x32xf32, #tpu.memory_space<vmem>>, vector<8x32xf32>,
    %86 = vector.extract_strided_slice %69 {offsets = [2, 0, 0], sizes = [1, 16, 32], strides = [1, 1, 1]} : vector<8x16x32xbf16> to vector<1x16x32xbf16>
    %87 = vector.shape_cast %86 : vector<1x16x32xbf16> to vector<16x32xbf16>
    %cst_38 = arith.constant dense<0.000000e+00> : vector<8x32xf32>
    %88 = tpu.matmul %71, %87, %cst_38 {dimension_numbers = #tpu.dot_dimension_numbers<[1], [0], [0], [1], [0, 0, 1, 1], [], []>} : vector<8x16xbf16>, vector<16x32xbf16>, vector<8x32xf32> -> vector<8x32xf32>
    %89 = vector.extract_strided_slice %70 {offsets = [2, 0], sizes = [1, 32], strides = [1, 1]} : vector<8x32xf32> to vector<1x32xf32>
    %90 = vector.broadcast %89 : vector<1x32xf32> to vector<8x32xf32>
    %91 = arith.addf %88, %90 : vector<8x32xf32>
    %c16 = arith.constant 16 : index
    %c0_39 = arith.constant 0 : index
    %92 = vector.load %arg16[%c16, %c0_39] : memref<64x32xf32, #tpu.memory_space<vmem>>, vector<8x32xf32>
    tpu.vector_store %arg16[%c16, %c0_39], %91 {strides = array<i32>} : memref<64x32xf32, #tpu.memory_space<vmem>>, vector<8x32xf32>,
    %93 = vector.extract_strided_slice %69 {offsets = [3, 0, 0], sizes = [1, 16, 32], strides = [1, 1, 1]} : vector<8x16x32xbf16> to vector<1x16x32xbf16>
    %94 = vector.shape_cast %93 : vector<1x16x32xbf16> to vector<16x32xbf16>
    %cst_40 = arith.constant dense<0.000000e+00> : vector<8x32xf32>
    %95 = tpu.matmul %71, %94, %cst_40 {dimension_numbers = #tpu.dot_dimension_numbers<[1], [0], [0], [1], [0, 0, 1, 1], [], []>} : vector<8x16xbf16>, vector<16x32xbf16>, vector<8x32xf32> -> vector<8x32xf32>
    %96 = vector.extract_strided_slice %70 {offsets = [3, 0], sizes = [1, 32], strides = [1, 1]} : vector<8x32xf32> to vector<1x32xf32>
    %97 = vector.broadcast %96 : vector<1x32xf32> to vector<8x32xf32>
    %98 = arith.addf %95, %97 : vector<8x32xf32>
    %c24 = arith.constant 24 : index
    %c0_41 = arith.constant 0 : index
    %99 = vector.load %arg16[%c24, %c0_41] : memref<64x32xf32, #tpu.memory_space<vmem>>, vector<8x32xf32>
    tpu.vector_store %arg16[%c24, %c0_41], %98 {strides = array<i32>} : memref<64x32xf32, #tpu.memory_space<vmem>>, vector<8x32xf32>,
    %100 = vector.extract_strided_slice %69 {offsets = [4, 0, 0], sizes = [1, 16, 32], strides = [1, 1, 1]} : vector<8x16x32xbf16> to vector<1x16x32xbf16>
    %101 = vector.shape_cast %100 : vector<1x16x32xbf16> to vector<16x32xbf16>
    %cst_42 = arith.constant dense<0.000000e+00> : vector<8x32xf32>
    %102 = tpu.matmul %71, %101, %cst_42 {dimension_numbers = #tpu.dot_dimension_numbers<[1], [0], [0], [1], [0, 0, 1, 1], [], []>} : vector<8x16xbf16>, vector<16x32xbf16>, vector<8x32xf32> -> vector<8x32xf32>
    %103 = vector.extract_strided_slice %70 {offsets = [4, 0], sizes = [1, 32], strides = [1, 1]} : vector<8x32xf32> to vector<1x32xf32>
    %104 = vector.broadcast %103 : vector<1x32xf32> to vector<8x32xf32>
    %105 = arith.addf %102, %104 : vector<8x32xf32>
    %c32 = arith.constant 32 : index
    %c0_43 = arith.constant 0 : index
    %106 = vector.load %arg16[%c32, %c0_43] : memref<64x32xf32, #tpu.memory_space<vmem>>, vector<8x32xf32>
    tpu.vector_store %arg16[%c32, %c0_43], %105 {strides = array<i32>} : memref<64x32xf32, #tpu.memory_space<vmem>>, vector<8x32xf32>,
    %107 = vector.extract_strided_slice %69 {offsets = [5, 0, 0], sizes = [1, 16, 32], strides = [1, 1, 1]} : vector<8x16x32xbf16> to vector<1x16x32xbf16>
    %108 = vector.shape_cast %107 : vector<1x16x32xbf16> to vector<16x32xbf16>
    %cst_44 = arith.constant dense<0.000000e+00> : vector<8x32xf32>
    %109 = tpu.matmul %71, %108, %cst_44 {dimension_numbers = #tpu.dot_dimension_numbers<[1], [0], [0], [1], [0, 0, 1, 1], [], []>} : vector<8x16xbf16>, vector<16x32xbf16>, vector<8x32xf32> -> vector<8x32xf32>
    %110 = vector.extract_strided_slice %70 {offsets = [5, 0], sizes = [1, 32], strides = [1, 1]} : vector<8x32xf32> to vector<1x32xf32>
    %111 = vector.broadcast %110 : vector<1x32xf32> to vector<8x32xf32>
    %112 = arith.addf %109, %111 : vector<8x32xf32>
    %c40 = arith.constant 40 : index
    %c0_45 = arith.constant 0 : index
    %113 = vector.load %arg16[%c40, %c0_45] : memref<64x32xf32, #tpu.memory_space<vmem>>, vector<8x32xf32>
    tpu.vector_store %arg16[%c40, %c0_45], %112 {strides = array<i32>} : memref<64x32xf32, #tpu.memory_space<vmem>>, vector<8x32xf32>,
    %114 = vector.extract_strided_slice %69 {offsets = [6, 0, 0], sizes = [1, 16, 32], strides = [1, 1, 1]} : vector<8x16x32xbf16> to vector<1x16x32xbf16>
    %115 = vector.shape_cast %114 : vector<1x16x32xbf16> to vector<16x32xbf16>
    %cst_46 = arith.constant dense<0.000000e+00> : vector<8x32xf32>
    %116 = tpu.matmul %71, %115, %cst_46 {dimension_numbers = #tpu.dot_dimension_numbers<[1], [0], [0], [1], [0, 0, 1, 1], [], []>} : vector<8x16xbf16>, vector<16x32xbf16>, vector<8x32xf32> -> vector<8x32xf32>
    %117 = vector.extract_strided_slice %70 {offsets = [6, 0], sizes = [1, 32], strides = [1, 1]} : vector<8x32xf32> to vector<1x32xf32>
    %118 = vector.broadcast %117 : vector<1x32xf32> to vector<8x32xf32>
    %119 = arith.addf %116, %118 : vector<8x32xf32>
    %c48 = arith.constant 48 : index
    %c0_47 = arith.constant 0 : index
    %120 = vector.load %arg16[%c48, %c0_47] : memref<64x32xf32, #tpu.memory_space<vmem>>, vector<8x32xf32>
    tpu.vector_store %arg16[%c48, %c0_47], %119 {strides = array<i32>} : memref<64x32xf32, #tpu.memory_space<vmem>>, vector<8x32xf32>,
    %121 = vector.extract_strided_slice %69 {offsets = [7, 0, 0], sizes = [1, 16, 32], strides = [1, 1, 1]} : vector<8x16x32xbf16> to vector<1x16x32xbf16>
    %122 = vector.shape_cast %121 : vector<1x16x32xbf16> to vector<16x32xbf16>
    %cst_48 = arith.constant dense<0.000000e+00> : vector<8x32xf32>
    %123 = tpu.matmul %71, %122, %cst_48 {dimension_numbers = #tpu.dot_dimension_numbers<[1], [0], [0], [1], [0, 0, 1, 1], [], []>} : vector<8x16xbf16>, vector<16x32xbf16>, vector<8x32xf32> -> vector<8x32xf32>
    %124 = vector.extract_strided_slice %70 {offsets = [7, 0], sizes = [1, 32], strides = [1, 1]} : vector<8x32xf32> to vector<1x32xf32>
    %125 = vector.broadcast %124 : vector<1x32xf32> to vector<8x32xf32>
    %126 = arith.addf %123, %125 : vector<8x32xf32>
    %c56 = arith.constant 56 : index
    %c0_49 = arith.constant 0 : index
    %127 = vector.load %arg16[%c56, %c0_49] : memref<64x32xf32, #tpu.memory_space<vmem>>, vector<8x32xf32>
    tpu.vector_store %arg16[%c56, %c0_49], %126 {strides = array<i32>} : memref<64x32xf32, #tpu.memory_space<vmem>>, vector<8x32xf32>,
    %c0_50 = arith.constant 0 : index
    %c0_51 = arith.constant 0 : index
    %128 = vector.load %arg16[%c0_50, %c0_51] : memref<64x32xf32, #tpu.memory_space<vmem>>, vector<64x32xf32>
    %129 = arith.truncf %128 : vector<64x32xf32> to vector<64x32xbf16>
    %c0_52 = arith.constant 0 : index
    %c0_53 = arith.constant 0 : index
    %130 = vector.load %arg10[%c0_52, %c0_53] : memref<32x16xbf16, #tpu.memory_space<vmem>>, vector<32x16xbf16>
    %cst_54 = arith.constant dense<0.000000e+00> : vector<64x16xf32>
    %131 = tpu.matmul %129, %130, %cst_54 {dimension_numbers = #tpu.dot_dimension_numbers<[1], [0], [0], [1], [0, 0, 1, 1], [], []>} : vector<64x32xbf16>, vector<32x16xbf16>, vector<64x16xf32> -> vector<64x16xf32>
    %c0_55 = arith.constant 0 : index
    %c0_56 = arith.constant 0 : index
    %132 = vector.load %arg3[%c0_55, %c0_56] : memref<128x64xbf16, #tpu.memory_space<vmem>>, vector<128x64xbf16>
    %133 = arith.truncf %131 : vector<64x16xf32> to vector<64x16xbf16>
    %cst_57 = arith.constant dense<0.000000e+00> : vector<128x16xf32>
    %134 = tpu.matmul %132, %133, %cst_57 {dimension_numbers = #tpu.dot_dimension_numbers<[1], [0], [0], [1], [0, 0, 1, 1], [], []>} : vector<128x64xbf16>, vector<64x16xbf16>, vector<128x16xf32> -> vector<128x16xf32>
    %c0_58 = arith.constant 0 : index
    %c0_59 = arith.constant 0 : index
    %135 = vector.load %arg11[%c0_58, %c0_59] : memref<1x16xf32, #tpu.memory_space<vmem>>, vector<1x16xf32>
    %136 = vector.broadcast %135 : vector<1x16xf32> to vector<128x16xf32>
    %137 = arith.addf %134, %136 : vector<128x16xf32>
    %cst_60 = arith.constant 0.000000e+00 : f32
    %138 = vector.broadcast %cst_60 : f32 to vector<128x16xf32>
    %139 = arith.maximumf %137, %138 : vector<128x16xf32>
    %c0_61 = arith.constant 0 : index
    %c0_62 = arith.constant 0 : index
    %140 = vector.load %arg12[%c0_61, %c0_62] : memref<8x16xbf16, #tpu.memory_space<vmem>>, vector<8x16xbf16>
    %cst_63 = arith.constant dense<0.000000e+00> : vector<128x16xf32>
    %141 = tpu.matmul %0, %140, %cst_63 {dimension_numbers = #tpu.dot_dimension_numbers<[1], [0], [0], [1], [0, 0, 1, 1], [], []>} : vector<128x8xbf16>, vector<8x16xbf16>, vector<128x16xf32> -> vector<128x16xf32>
    %142 = arith.addf %139, %141 : vector<128x16xf32>
    %c0_64 = arith.constant 0 : index
    %c0_65 = arith.constant 0 : index
    %143 = vector.load %arg13[%c0_64, %c0_65] : memref<1x16xf32, #tpu.memory_space<vmem>>, vector<1x16xf32>
    %144 = vector.broadcast %143 : vector<1x16xf32> to vector<128x16xf32>
    %145 = arith.addf %142, %144 : vector<128x16xf32>
    %c0_66 = arith.constant 0 : index
    %c0_67 = arith.constant 0 : index
    %146 = vector.load %arg14[%c0_66, %c0_67] : memref<128x16xf32, #tpu.memory_space<vmem>>, vector<128x16xf32>
    tpu.vector_store %arg14[%c0_66, %c0_67], %145 {strides = array<i32>} : memref<128x16xf32, #tpu.memory_space<vmem>>, vector<128x16xf32>,
    return
  }
}

</mosaic_0001>

<llo_original>
// kernel: tpu_custom_call.1
$region0: #{tpu_custom_call.1}
  #allocation0 [shape = 'u32[]', space=smem, size = 0x4, offset = 0x4, fixed_abs, tag = 'smem constant byte address 0x4 - core index']
  #allocation1 [shape = 'u32[72,128]{1,0:T(1,128)}', space=vmem, size = 0x9000, scoped, tag = 'internal scratch']
  #allocation2 [shape = 'f32[64,32]{1,0:T(8,128)}', space=vmem, size = 0x8000, scoped, tag = 'scratch operand']
  %s0 = inlined_call_operand.vmem [shape: bf16[128,8], index: 0, kind: input, shape index: {}]
  %s1 = inlined_call_operand.vmem [shape: bf16[128,128], index: 1, kind: input, shape index: {}]
  %s2 = inlined_call_operand.vmem [shape: bf16[64,128], index: 2, kind: input, shape index: {}]
  %s3 = inlined_call_operand.vmem [shape: bf16[128,64], index: 3, kind: input, shape index: {}]
  %s4 = inlined_call_operand.vmem [shape: bf16[8,32], index: 4, kind: input, shape index: {}]
  %s5 = inlined_call_operand.vmem [shape: f32[1,32], index: 5, kind: input, shape index: {}]
  %s6 = inlined_call_operand.vmem [shape: bf16[8,32,16], index: 6, kind: input, shape index: {}]
  %s7 = inlined_call_operand.vmem [shape: f32[1,16], index: 7, kind: input, shape index: {}]
  %s8 = inlined_call_operand.vmem [shape: bf16[8,16,32], index: 8, kind: input, shape index: {}]
  %s9 = inlined_call_operand.vmem [shape: f32[8,32], index: 9, kind: input, shape index: {}]
  %s10 = inlined_call_operand.vmem [shape: bf16[32,16], index: 10, kind: input, shape index: {}]
  %s11 = inlined_call_operand.vmem [shape: f32[1,16], index: 11, kind: input, shape index: {}]
  %s12 = inlined_call_operand.vmem [shape: bf16[8,16], index: 12, kind: input, shape index: {}]
  %s13 = inlined_call_operand.vmem [shape: f32[1,16], index: 13, kind: input, shape index: {}]
  %s14 = inlined_call_operand.vmem [shape: f32[128,16], index: 14, kind: output, shape index: {0}]
  %s15 = inlined_call_operand.hbm [shape: f32[8,16], index: 15, kind: output, shape index: {1}]
  %16 = xla_tuple %s14, %s15
  %s17 = sld [smem:[#allocation0]]
  $region74: #{tpu_custom_call.1} parent=0
    _
  %s19 = ssub.s32 1, %s17
  %s20 = scalar_select 0, %s19, %s17
  $region1: #{tpu_custom_call.1} parent=0
    #allocation3 [shape = 'u8[4096]{0}', space=vmem, size = 0x1000, scoped, tag = 'output window, operand 1, single buffered']
    #allocation4 [shape = 's32[1]{0}', space=sflag, size = 0x4, scoped, tag = 'scoped memory for tpu_custom_call.1']
    %21 = vsyncpa [#allocation4], 0
    // Predicated region
    $region2: #{tpu_custom_call.1} parent=1 // pred_check
      _
    $region3: #{tpu_custom_call.1} parent=1 // pred_check_branch
      %23 = sbr.rel (0) target = $region5
    $region4: #{tpu_custom_call.1} parent=1 // pred_region
      _
    $region5: #{tpu_custom_call.1} parent=1 // pred_fallthru
      _
    // Predicated region
    $region6: #{tpu_custom_call.1} parent=1 // pred_check
      _
    $region7: #{tpu_custom_call.1} parent=1 // pred_check_branch
      %25 = sbr.rel (0) target = $region9
    $region8: #{tpu_custom_call.1} parent=1 // pred_region
      _
    $region9: #{tpu_custom_call.1} parent=1 // pred_fallthru
      _
    // Predicated region
    $region10: #{tpu_custom_call.1} parent=1 // pred_check
      _
    $region11: #{tpu_custom_call.1} parent=1 // pred_check_branch
      %27 = sbr.rel (0) target = $region13
    $region12: #{tpu_custom_call.1} parent=1 // pred_region
      _
    $region13: #{tpu_custom_call.1} parent=1 // pred_fallthru
      _
    // Predicated region
    $region14: #{tpu_custom_call.1} parent=1 // pred_check
      _
    $region15: #{tpu_custom_call.1} parent=1 // pred_check_branch
      %29 = sbr.rel (0) target = $region17
    $region16: #{tpu_custom_call.1} parent=1 // pred_region
      _
    $region17: #{tpu_custom_call.1} parent=1 // pred_fallthru
      _
    // Predicated region
    $region18: #{tpu_custom_call.1} parent=1 // pred_check
      _
    $region19: #{tpu_custom_call.1} parent=1 // pred_check_branch
      %31 = sbr.rel (0) target = $region21
    $region20: #{tpu_custom_call.1} parent=1 // pred_region
      _
    $region21: #{tpu_custom_call.1} parent=1 // pred_fallthru
      _
    // Predicated region
    $region22: #{tpu_custom_call.1} parent=1 // pred_check
      _
    $region23: #{tpu_custom_call.1} parent=1 // pred_check_branch
      %33 = sbr.rel (0) target = $region25
    $region24: #{tpu_custom_call.1} parent=1 // pred_region
      _
    $region25: #{tpu_custom_call.1} parent=1 // pred_fallthru
      _
    // Predicated region
    $region26: #{tpu_custom_call.1} parent=1 // pred_check
      _
    $region27: #{tpu_custom_call.1} parent=1 // pred_check_branch
      %35 = sbr.rel (0) target = $region29
    $region28: #{tpu_custom_call.1} parent=1 // pred_region
      _
    $region29: #{tpu_custom_call.1} parent=1 // pred_fallthru
      _
    // Predicated region
    $region30: #{tpu_custom_call.1} parent=1 // pred_check
      _
    $region31: #{tpu_custom_call.1} parent=1 // pred_check_branch
      %37 = sbr.rel (0) target = $region33
    $region32: #{tpu_custom_call.1} parent=1 // pred_region
      _
    $region33: #{tpu_custom_call.1} parent=1 // pred_fallthru
      _
    // Predicated region
    $region34: #{tpu_custom_call.1} parent=1 // pred_check
      _
    $region35: #{tpu_custom_call.1} parent=1 // pred_check_branch
      %39 = sbr.rel (0) target = $region37
    $region36: #{tpu_custom_call.1} parent=1 // pred_region
      _
    $region37: #{tpu_custom_call.1} parent=1 // pred_fallthru
      _
    // Predicated region
    $region38: #{tpu_custom_call.1} parent=1 // pred_check
      _
    $region39: #{tpu_custom_call.1} parent=1 // pred_check_branch
      %41 = sbr.rel (0) target = $region41
    $region40: #{tpu_custom_call.1} parent=1 // pred_region
      _
    $region41: #{tpu_custom_call.1} parent=1 // pred_fallthru
      _
    // Predicated region
    $region42: #{tpu_custom_call.1} parent=1 // pred_check
      _
    $region43: #{tpu_custom_call.1} parent=1 // pred_check_branch
      %43 = sbr.rel (0) target = $region45
    $region44: #{tpu_custom_call.1} parent=1 // pred_region
      _
    $region45: #{tpu_custom_call.1} parent=1 // pred_fallthru
      _
    // Predicated region
    $region46: #{tpu_custom_call.1} parent=1 // pred_check
      _
    $region47: #{tpu_custom_call.1} parent=1 // pred_check_branch
      %45 = sbr.rel (0) target = $region49
    $region48: #{tpu_custom_call.1} parent=1 // pred_region
      _
    $region49: #{tpu_custom_call.1} parent=1 // pred_fallthru
      _
    // Predicated region
    $region50: #{tpu_custom_call.1} parent=1 // pred_check
      _
    $region51: #{tpu_custom_call.1} parent=1 // pred_check_branch
      %47 = sbr.rel (0) target = $region53
    $region52: #{tpu_custom_call.1} parent=1 // pred_region
      _
    $region53: #{tpu_custom_call.1} parent=1 // pred_fallthru
      _
    // Predicated region
    $region54: #{tpu_custom_call.1} parent=1 // pred_check
      _
    $region55: #{tpu_custom_call.1} parent=1 // pred_check_branch
      %49 = sbr.rel (0) target = $region57
    $region56: #{tpu_custom_call.1} parent=1 // pred_region
      _
    $region57: #{tpu_custom_call.1} parent=1 // pred_fallthru
      _
    %v51 = vld [vmem:[%s0] sm:$0xf]
    %v52 = vld [vmem:[%s0 + $0x4] sm:$0xf]
    %v53 = vld [vmem:[%s0 + $0x8] sm:$0xf]
    %v54 = vld [vmem:[%s0 + $0xc] sm:$0xf]
    %v55 = vld [vmem:[%s0 + $0x10] sm:$0xf]
    %v56 = vld [vmem:[%s0 + $0x14] sm:$0xf]
    %v57 = vld [vmem:[%s0 + $0x18] sm:$0xf]
    %v58 = vld [vmem:[%s0 + $0x1c] sm:$0xf]
    %v59 = vld [vmem:[%s0 + $0x20] sm:$0xf]
    %v60 = vld [vmem:[%s0 + $0x24] sm:$0xf]
    %v61 = vld [vmem:[%s0 + $0x28] sm:$0xf]
    %v62 = vld [vmem:[%s0 + $0x2c] sm:$0xf]
    %v63 = vld [vmem:[%s0 + $0x30] sm:$0xf]
    %v64 = vld [vmem:[%s0 + $0x34] sm:$0xf]
    %v65 = vld [vmem:[%s0 + $0x38] sm:$0xf]
    %v66 = vld [vmem:[%s0 + $0x3c] sm:$0xf]
    %v67 = vld [vmem:[%s4] sm:$0xf]
    %v84 = vunpack.c.l.b16 %v51
    %v85 = vunpack.c.l.b16 %v52
    %v86 = vunpack.c.l.b16 %v53
    %v87 = vunpack.c.l.b16 %v54
    %v88 = vunpack.c.l.b16 %v55
    %v89 = vunpack.c.l.b16 %v56
    %v90 = vunpack.c.l.b16 %v57
    %v91 = vunpack.c.l.b16 %v58
    %v92 = vunpack.c.l.b16 %v59
    %v93 = vunpack.c.l.b16 %v60
    %v94 = vunpack.c.l.b16 %v61
    %v95 = vunpack.c.l.b16 %v62
    %v96 = vunpack.c.l.b16 %v63
    %v97 = vunpack.c.l.b16 %v64
    %v98 = vunpack.c.l.b16 %v65
    %v99 = vunpack.c.l.b16 %v66
    %v100 = vpack.c.b16 %v85, %v84
    %v101 = vpack.c.b16 %v87, %v86
    %v102 = vpack.c.b16 %v89, %v88
    %v103 = vpack.c.b16 %v91, %v90
    %v104 = vpack.c.b16 %v93, %v92
    %v105 = vpack.c.b16 %v95, %v94
    %v106 = vpack.c.b16 %v97, %v96
    %v107 = vpack.c.b16 %v99, %v98
    %vm108 = vcmask 64512
    %v110 = vsel %vm108, %v100, 0
    %v113 = vsel %vm108, %v101, 0
    %v116 = vsel %vm108, %v102, 0
    %v119 = vsel %vm108, %v103, 0
    %v122 = vsel %vm108, %v104, 0
    %v125 = vsel %vm108, %v105, 0
    %v128 = vsel %vm108, %v106, 0
    %v131 = vsel %vm108, %v107, 0
    %vm133 = vcmask 1043456
    %v135 = vsel %vm133, %v67, 0
    %137 = vmatpush.bf16.msra.mxu0 0
    %138 = vmatpush.bf16.msra.mxu0 0
    %139 = vmatpush.bf16.msra.mxu0 0
    %140 = vmatpush.bf16.msra.mxu0 0
    %141 = vmatpush.bf16.msra.mxu0 0
    %142 = vmatpush.bf16.msra.mxu0 0
    %143 = vmatpush.bf16.msra.mxu0 0
    %144 = vmatpush.bf16.msra.mxu0 %v135
    %145 = vmatmul.bf16.gmra.mxu0 %v110
    %v146 = vpop.f32.mrf.mxu0
    %v147 = vadd.f32 0.0, %v146
    %v148 = vpop.f32.mrf.mxu0
    %v149 = vadd.f32 0.0, %v148
    %150 = vmatmul.bf16.gmra.mxu0 %v113
    %v151 = vpop.f32.mrf.mxu0
    %v152 = vadd.f32 0.0, %v151
    %v153 = vpop.f32.mrf.mxu0
    %v154 = vadd.f32 0.0, %v153
    %155 = vmatmul.bf16.gmra.mxu0 %v116
    %v156 = vpop.f32.mrf.mxu0
    %v157 = vadd.f32 0.0, %v156
    %v158 = vpop.f32.mrf.mxu0
    %v159 = vadd.f32 0.0, %v158
    %160 = vmatmul.bf16.gmra.mxu0 %v119
    %v161 = vpop.f32.mrf.mxu0
    %v162 = vadd.f32 0.0, %v161
    %v163 = vpop.f32.mrf.mxu0
    %v164 = vadd.f32 0.0, %v163
    %165 = vmatmul.bf16.gmra.mxu0 %v122
    %v166 = vpop.f32.mrf.mxu0
    %v167 = vadd.f32 0.0, %v166
    %v168 = vpop.f32.mrf.mxu0
    %v169 = vadd.f32 0.0, %v168
    %170 = vmatmul.bf16.gmra.mxu0 %v125
    %v171 = vpop.f32.mrf.mxu0
    %v172 = vadd.f32 0.0, %v171
    %v173 = vpop.f32.mrf.mxu0
    %v174 = vadd.f32 0.0, %v173
    %175 = vmatmul.bf16.gmra.mxu0 %v128
    %v176 = vpop.f32.mrf.mxu0
    %v177 = vadd.f32 0.0, %v176
    %v178 = vpop.f32.mrf.mxu0
    %v179 = vadd.f32 0.0, %v178
    %180 = vmatmul.bf16.gmra.mxu0 %v131
    %v181 = vpop.f32.mrf.mxu0
    %v182 = vadd.f32 0.0, %v181
    %v183 = vpop.f32.mrf.mxu0
    %v184 = vadd.f32 0.0, %v183
    %185 = vdwg.mxu0
    %v186 = vld [vmem:[%s1] sm:$0xf]
    %v187 = vld [vmem:[%s1 + $0x4] sm:$0xf]
    %v188 = vld [vmem:[%s1 + $0x8] sm:$0xf]
    %v189 = vld [vmem:[%s1 + $0xc] sm:$0xf]
    %v190 = vld [vmem:[%s1 + $0x10] sm:$0xf]
    %v191 = vld [vmem:[%s1 + $0x14] sm:$0xf]
    %v192 = vld [vmem:[%s1 + $0x18] sm:$0xf]
    %v193 = vld [vmem:[%s1 + $0x1c] sm:$0xf]
    %v194 = vld [vmem:[%s1 + $0x20] sm:$0xf]
    %v195 = vld [vmem:[%s1 + $0x24] sm:$0xf]
    %v196 = vld [vmem:[%s1 + $0x28] sm:$0xf]
    %v197 = vld [vmem:[%s1 + $0x2c] sm:$0xf]
    %v198 = vld [vmem:[%s1 + $0x30] sm:$0xf]
    %v199 = vld [vmem:[%s1 + $0x34] sm:$0xf]
    %v200 = vld [vmem:[%s1 + $0x38] sm:$0xf]
    %v201 = vld [vmem:[%s1 + $0x3c] sm:$0xf]
    %v202 = vpack.c.bf16 %v149, %v147
    %v203 = vpack.c.bf16 %v154, %v152
    %v204 = vpack.c.bf16 %v159, %v157
    %v205 = vpack.c.bf16 %v164, %v162
    %v206 = vpack.c.bf16 %v169, %v167
    %v207 = vpack.c.bf16 %v174, %v172
    %v208 = vpack.c.bf16 %v179, %v177
    %v209 = vpack.c.bf16 %v184, %v182
    %v210 = vld [vmem:[%s5] sm:$0x1]
    %v212 = vperm.slane %v210, 0
    %v230 = vunpack.c.l.b16 %v186
    %v231 = vunpack.c.l.b16 %v187
    %v232 = vunpack.c.l.b16 %v188
    %v233 = vunpack.c.l.b16 %v189
    %v234 = vunpack.c.l.b16 %v190
    %v235 = vunpack.c.l.b16 %v191
    %v236 = vunpack.c.l.b16 %v192
    %v237 = vunpack.c.l.b16 %v193
    %v238 = vunpack.c.l.b16 %v194
    %v239 = vunpack.c.l.b16 %v195
    %v240 = vunpack.c.l.b16 %v196
    %v241 = vunpack.c.l.b16 %v197
    %v242 = vunpack.c.l.b16 %v198
    %v243 = vunpack.c.l.b16 %v199
    %v244 = vunpack.c.l.b16 %v200
    %v245 = vunpack.c.l.b16 %v201
    %v246 = vpack.c.b16 %v231, %v230
    %v247 = vpack.c.b16 %v233, %v232
    %v248 = vpack.c.b16 %v235, %v234
    %v249 = vpack.c.b16 %v237, %v236
    %v250 = vpack.c.b16 %v239, %v238
    %v251 = vpack.c.b16 %v241, %v240
    %v252 = vpack.c.b16 %v243, %v242
    %v253 = vpack.c.b16 %v245, %v244
    %262 = vmatpush.bf16.msra.mxu0 %v209
    %263 = vmatpush.bf16.msra.mxu0 %v208
    %264 = vmatpush.bf16.msra.mxu0 %v207
    %265 = vmatpush.bf16.msra.mxu0 %v206
    %266 = vmatpush.bf16.msra.mxu0 %v205
    %267 = vmatpush.bf16.msra.mxu0 %v204
    %268 = vmatpush.bf16.msra.mxu0 %v203
    %269 = vmatpush.bf16.msra.mxu0 %v202
    %270 = vmatmul.bf16.gmra.mxu0 %v246
    %v271 = vpop.f32.mrf.mxu0
    %v272 = vadd.f32 %v212, %v271
    %v273 = vpop.f32.mrf.mxu0
    %v274 = vadd.f32 %v212, %v273
    %275 = vmatmul.bf16.gmra.mxu0 %v247
    %v276 = vpop.f32.mrf.mxu0
    %v277 = vadd.f32 %v212, %v276
    %v278 = vpop.f32.mrf.mxu0
    %v279 = vadd.f32 %v212, %v278
    %280 = vmatmul.bf16.gmra.mxu0 %v248
    %v281 = vpop.f32.mrf.mxu0
    %v282 = vadd.f32 %v212, %v281
    %v283 = vpop.f32.mrf.mxu0
    %v284 = vadd.f32 %v212, %v283
    %285 = vmatmul.bf16.gmra.mxu0 %v249
    %v286 = vpop.f32.mrf.mxu0
    %v287 = vadd.f32 %v212, %v286
    %v288 = vpop.f32.mrf.mxu0
    %v289 = vadd.f32 %v212, %v288
    %290 = vmatmul.bf16.gmra.mxu0 %v250
    %v291 = vpop.f32.mrf.mxu0
    %v292 = vadd.f32 %v212, %v291
    %v293 = vpop.f32.mrf.mxu0
    %v294 = vadd.f32 %v212, %v293
    %295 = vmatmul.bf16.gmra.mxu0 %v251
    %v296 = vpop.f32.mrf.mxu0
    %v297 = vadd.f32 %v212, %v296
    %v298 = vpop.f32.mrf.mxu0
    %v299 = vadd.f32 %v212, %v298
    %300 = vmatmul.bf16.gmra.mxu0 %v252
    %v301 = vpop.f32.mrf.mxu0
    %v302 = vadd.f32 %v212, %v301
    %v303 = vpop.f32.mrf.mxu0
    %v304 = vadd.f32 %v212, %v303
    %305 = vmatmul.bf16.gmra.mxu0 %v253
    %v306 = vpop.f32.mrf.mxu0
    %v307 = vadd.f32 %v212, %v306
    %v308 = vpop.f32.mrf.mxu0
    %v309 = vadd.f32 %v212, %v308
    %310 = vdwg.mxu0
    %v311 = vmax.f32 %v272, 0.0
    %v312 = vmax.f32 %v274, 0.0
    %v313 = vmax.f32 %v277, 0.0
    %v314 = vmax.f32 %v279, 0.0
    %v315 = vmax.f32 %v282, 0.0
    %v316 = vmax.f32 %v284, 0.0
    %v317 = vmax.f32 %v287, 0.0
    %v318 = vmax.f32 %v289, 0.0
    %v319 = vmax.f32 %v292, 0.0
    %v320 = vmax.f32 %v294, 0.0
    %v321 = vmax.f32 %v297, 0.0
    %v322 = vmax.f32 %v299, 0.0
    %v323 = vmax.f32 %v302, 0.0
    %v324 = vmax.f32 %v304, 0.0
    %v325 = vmax.f32 %v307, 0.0
    %v326 = vmax.f32 %v309, 0.0
    %v327 = vld [vmem:[%s2] sm:$0xf]
    %v328 = vld [vmem:[%s2 + $0x4] sm:$0xf]
    %v329 = vld [vmem:[%s2 + $0x8] sm:$0xf]
    %v330 = vld [vmem:[%s2 + $0xc] sm:$0xf]
    %v331 = vld [vmem:[%s2 + $0x10] sm:$0xf]
    %v332 = vld [vmem:[%s2 + $0x14] sm:$0xf]
    %v333 = vld [vmem:[%s2 + $0x18] sm:$0xf]
    %v334 = vld [vmem:[%s2 + $0x1c] sm:$0xf]
    %v335 = vpack.c.bf16 %v312, %v311
    %v336 = vpack.c.bf16 %v314, %v313
    %v337 = vpack.c.bf16 %v316, %v315
    %v338 = vpack.c.bf16 %v318, %v317
    %v339 = vpack.c.bf16 %v320, %v319
    %v340 = vpack.c.bf16 %v322, %v321
    %v341 = vpack.c.bf16 %v324, %v323
    %v342 = vpack.c.bf16 %v326, %v325
    %v351 = vunpack.c.l.b16 %v327
    %v352 = vunpack.c.l.b16 %v328
    %v353 = vunpack.c.l.b16 %v329
    %v354 = vunpack.c.l.b16 %v330
    %v355 = vunpack.c.l.b16 %v331
    %v356 = vunpack.c.l.b16 %v332
    %v357 = vunpack.c.l.b16 %v333
    %v358 = vunpack.c.l.b16 %v334
    %v359 = vpack.c.b16 %v352, %v351
    %v360 = vpack.c.b16 %v354, %v353
    %v361 = vpack.c.b16 %v356, %v355
    %v362 = vpack.c.b16 %v358, %v357
    %367 = vmatpush.bf16.msra.mxu0 %v342
    %368 = vmatpush.bf16.msra.mxu0 %v341
    %369 = vmatpush.bf16.msra.mxu0 %v340
    %370 = vmatpush.bf16.msra.mxu0 %v339
    %371 = vmatpush.bf16.msra.mxu0 %v338
    %372 = vmatpush.bf16.msra.mxu0 %v337
    %373 = vmatpush.bf16.msra.mxu0 %v336
    %374 = vmatpush.bf16.msra.mxu0 %v335
    %375 = vmatmul.bf16.gmra.mxu0 %v359
    %v376 = vpop.f32.mrf.mxu0
    %v377 = vadd.f32 0.0, %v376
    %v378 = vpop.f32.mrf.mxu0
    %v379 = vadd.f32 0.0, %v378
    %380 = vmatmul.bf16.gmra.mxu0 %v360
    %v381 = vpop.f32.mrf.mxu0
    %v382 = vadd.f32 0.0, %v381
    %v383 = vpop.f32.mrf.mxu0
    %v384 = vadd.f32 0.0, %v383
    %385 = vmatmul.bf16.gmra.mxu0 %v361
    %v386 = vpop.f32.mrf.mxu0
    %v387 = vadd.f32 0.0, %v386
    %v388 = vpop.f32.mrf.mxu0
    %v389 = vadd.f32 0.0, %v388
    %390 = vmatmul.bf16.gmra.mxu0 %v362
    %v391 = vpop.f32.mrf.mxu0
    %v392 = vadd.f32 0.0, %v391
    %v393 = vpop.f32.mrf.mxu0
    %v394 = vadd.f32 0.0, %v393
    %395 = vdwg.mxu0
    %v396 = vld [vmem:[%s6] sm:$0xf]
    %v397 = vld [vmem:[%s6 + $0x4] sm:$0xf]
    %v398 = vld [vmem:[%s6 + $0x8] sm:$0xf]
    %v399 = vld [vmem:[%s6 + $0xc] sm:$0xf]
    %v400 = vld [vmem:[%s6 + $0x10] sm:$0xf]
    %v401 = vld [vmem:[%s6 + $0x14] sm:$0xf]
    %v402 = vld [vmem:[%s6 + $0x18] sm:$0xf]
    %v403 = vld [vmem:[%s6 + $0x1c] sm:$0xf]
    %v404 = vld [vmem:[%s6 + $0x20] sm:$0xf]
    %v405 = vld [vmem:[%s6 + $0x24] sm:$0xf]
    %v406 = vld [vmem:[%s6 + $0x28] sm:$0xf]
    %v407 = vld [vmem:[%s6 + $0x2c] sm:$0xf]
    %v408 = vld [vmem:[%s6 + $0x30] sm:$0xf]
    %v409 = vld [vmem:[%s6 + $0x34] sm:$0xf]
    %v410 = vld [vmem:[%s6 + $0x38] sm:$0xf]
    %v411 = vld [vmem:[%s6 + $0x3c] sm:$0xf]
    %v412 = vld [vmem:[%s6 + $0x40] sm:$0xf]
    %v413 = vld [vmem:[%s6 + $0x44] sm:$0xf]
    %v414 = vld [vmem:[%s6 + $0x48] sm:$0xf]
    %v415 = vld [vmem:[%s6 + $0x4c] sm:$0xf]
    %v416 = vld [vmem:[%s6 + $0x50] sm:$0xf]
    %v417 = vld [vmem:[%s6 + $0x54] sm:$0xf]
    %v418 = vld [vmem:[%s6 + $0x58] sm:$0xf]
    %v419 = vld [vmem:[%s6 + $0x5c] sm:$0xf]
    %v420 = vld [vmem:[%s6 + $0x60] sm:$0xf]
    %v421 = vld [vmem:[%s6 + $0x64] sm:$0xf]
    %v422 = vld [vmem:[%s6 + $0x68] sm:$0xf]
    %v423 = vld [vmem:[%s6 + $0x6c] sm:$0xf]
    %v424 = vld [vmem:[%s6 + $0x70] sm:$0xf]
    %v425 = vld [vmem:[%s6 + $0x74] sm:$0xf]
    %v426 = vld [vmem:[%s6 + $0x78] sm:$0xf]
    %v427 = vld [vmem:[%s6 + $0x7c] sm:$0xf]
    %v428 = vpack.c.bf16 %v377, %v377
    %v429 = vpack.c.bf16 %v379, %v379
    %v434 = vunpack.c.l.b16 %v400
    %v435 = vunpack.c.l.b16 %v401
    %v436 = vunpack.c.l.b16 %v402
    %v437 = vunpack.c.l.b16 %v403
    %v438 = vpack.c.b16 %v435, %v434
    %v439 = vpack.c.b16 %v437, %v436
    %vm442 = vcmask 261120
    %v444 = vsel %vm442, %v429, 0
    %446 = vmatpush.bf16.msra.mxu0 0
    %447 = vmatpush.bf16.msra.mxu0 0
    %448 = vmatpush.bf16.msra.mxu0 0
    %449 = vmatpush.bf16.msra.mxu0 0
    %450 = vmatpush.bf16.msra.mxu0 0
    %451 = vmatpush.bf16.msra.mxu0 0
    %452 = vmatpush.bf16.msra.mxu0 %v439
    %453 = vmatpush.bf16.msra.mxu0 %v438
    %454 = vmatmul.bf16.gmra.mxu0 %v444
    %v455 = vpop.f32.mrf.mxu0
    %v456 = vadd.f32 0.0, %v455
    %v457 = vpop.f32.mrf.mxu0
    %458 = vdwg.mxu0
    %v463 = vunpack.c.l.b16 %v396
    %v464 = vunpack.c.l.b16 %v397
    %v465 = vunpack.c.l.b16 %v398
    %v466 = vunpack.c.l.b16 %v399
    %v467 = vpack.c.b16 %v464, %v463
    %v468 = vpack.c.b16 %v466, %v465
    %v472 = vsel %vm442, %v428, 0
    %474 = vmatpush.bf16.msra.mxu0 0
    %475 = vmatpush.bf16.msra.mxu0 0
    %476 = vmatpush.bf16.msra.mxu0 0
    %477 = vmatpush.bf16.msra.mxu0 0
    %478 = vmatpush.bf16.msra.mxu0 0
    %479 = vmatpush.bf16.msra.mxu0 0
    %480 = vmatpush.bf16.msra.mxu0 %v468
    %481 = vmatpush.bf16.msra.mxu0 %v467
    %482 = vmatmul.bf16.gmra.mxu0 %v472
    %v483 = vpop.f32.mrf.mxu0
    %v484 = vadd.f32 %v456, %v483
    %v485 = vpop.f32.mrf.mxu0
    %486 = vdwg.mxu0
    %v487 = vpack.c.bf16 %v382, %v382
    %v492 = vunpack.c.l.b16 %v404
    %v493 = vunpack.c.l.b16 %v405
    %v494 = vunpack.c.l.b16 %v406
    %v495 = vunpack.c.l.b16 %v407
    %v496 = vpack.c.b16 %v493, %v492
    %v497 = vpack.c.b16 %v495, %v494
    %v501 = vsel %vm442, %v487, 0
    %503 = vmatpush.bf16.msra.mxu0 0
    %504 = vmatpush.bf16.msra.mxu0 0
    %505 = vmatpush.bf16.msra.mxu0 0
    %506 = vmatpush.bf16.msra.mxu0 0
    %507 = vmatpush.bf16.msra.mxu0 0
    %508 = vmatpush.bf16.msra.mxu0 0
    %509 = vmatpush.bf16.msra.mxu0 %v497
    %510 = vmatpush.bf16.msra.mxu0 %v496
    %511 = vmatmul.bf16.gmra.mxu0 %v501
    %v512 = vpop.f32.mrf.mxu0
    %v513 = vadd.f32 0.0, %v512
    %v514 = vpop.f32.mrf.mxu0
    %515 = vdwg.mxu0
    %v516 = vadd.f32 %v484, %v513
    %v517 = vpack.c.bf16 %v384, %v384
    %v522 = vunpack.c.l.b16 %v408
    %v523 = vunpack.c.l.b16 %v409
    %v524 = vunpack.c.l.b16 %v410
    %v525 = vunpack.c.l.b16 %v411
    %v526 = vpack.c.b16 %v523, %v522
    %v527 = vpack.c.b16 %v525, %v524
    %v531 = vsel %vm442, %v517, 0
    %533 = vmatpush.bf16.msra.mxu0 0
    %534 = vmatpush.bf16.msra.mxu0 0
    %535 = vmatpush.bf16.msra.mxu0 0
    %536 = vmatpush.bf16.msra.mxu0 0
    %537 = vmatpush.bf16.msra.mxu0 0
    %538 = vmatpush.bf16.msra.mxu0 0
    %539 = vmatpush.bf16.msra.mxu0 %v527
    %540 = vmatpush.bf16.msra.mxu0 %v526
    %541 = vmatmul.bf16.gmra.mxu0 %v531
    %v542 = vpop.f32.mrf.mxu0
    %v543 = vadd.f32 0.0, %v542
    %v544 = vpop.f32.mrf.mxu0
    %545 = vdwg.mxu0
    %v546 = vadd.f32 %v516, %v543
    %v547 = vpack.c.bf16 %v387, %v387
    %v552 = vunpack.c.l.b16 %v412
    %v553 = vunpack.c.l.b16 %v413
    %v554 = vunpack.c.l.b16 %v414
    %v555 = vunpack.c.l.b16 %v415
    %v556 = vpack.c.b16 %v553, %v552
    %v557 = vpack.c.b16 %v555, %v554
    %v561 = vsel %vm442, %v547, 0
    %563 = vmatpush.bf16.msra.mxu0 0
    %564 = vmatpush.bf16.msra.mxu0 0
    %565 = vmatpush.bf16.msra.mxu0 0
    %566 = vmatpush.bf16.msra.mxu0 0
    %567 = vmatpush.bf16.msra.mxu0 0
    %568 = vmatpush.bf16.msra.mxu0 0
    %569 = vmatpush.bf16.msra.mxu0 %v557
    %570 = vmatpush.bf16.msra.mxu0 %v556
    %571 = vmatmul.bf16.gmra.mxu0 %v561
    %v572 = vpop.f32.mrf.mxu0
    %v573 = vadd.f32 0.0, %v572
    %v574 = vpop.f32.mrf.mxu0
    %575 = vdwg.mxu0
    %v576 = vadd.f32 %v546, %v573
    %v577 = vpack.c.bf16 %v389, %v389
    %v582 = vunpack.c.l.b16 %v416
    %v583 = vunpack.c.l.b16 %v417
    %v584 = vunpack.c.l.b16 %v418
    %v585 = vunpack.c.l.b16 %v419
    %v586 = vpack.c.b16 %v583, %v582
    %v587 = vpack.c.b16 %v585, %v584
    %v591 = vsel %vm442, %v577, 0
    %593 = vmatpush.bf16.msra.mxu0 0
    %594 = vmatpush.bf16.msra.mxu0 0
    %595 = vmatpush.bf16.msra.mxu0 0
    %596 = vmatpush.bf16.msra.mxu0 0
    %597 = vmatpush.bf16.msra.mxu0 0
    %598 = vmatpush.bf16.msra.mxu0 0
    %599 = vmatpush.bf16.msra.mxu0 %v587
    %600 = vmatpush.bf16.msra.mxu0 %v586
    %601 = vmatmul.bf16.gmra.mxu0 %v591
    %v602 = vpop.f32.mrf.mxu0
    %v603 = vadd.f32 0.0, %v602
    %v604 = vpop.f32.mrf.mxu0
    %605 = vdwg.mxu0
    %v606 = vadd.f32 %v576, %v603
    %v607 = vpack.c.bf16 %v392, %v392
    %v612 = vunpack.c.l.b16 %v420
    %v613 = vunpack.c.l.b16 %v421
    %v614 = vunpack.c.l.b16 %v422
    %v615 = vunpack.c.l.b16 %v423
    %v616 = vpack.c.b16 %v613, %v612
    %v617 = vpack.c.b16 %v615, %v614
    %v621 = vsel %vm442, %v607, 0
    %623 = vmatpush.bf16.msra.mxu0 0
    %624 = vmatpush.bf16.msra.mxu0 0
    %625 = vmatpush.bf16.msra.mxu0 0
    %626 = vmatpush.bf16.msra.mxu0 0
    %627 = vmatpush.bf16.msra.mxu0 0
    %628 = vmatpush.bf16.msra.mxu0 0
    %629 = vmatpush.bf16.msra.mxu0 %v617
    %630 = vmatpush.bf16.msra.mxu0 %v616
    %631 = vmatmul.bf16.gmra.mxu0 %v621
    %v632 = vpop.f32.mrf.mxu0
    %v633 = vadd.f32 0.0, %v632
    %v634 = vpop.f32.mrf.mxu0
    %635 = vdwg.mxu0
    %v636 = vadd.f32 %v606, %v633
    %v637 = vpack.c.bf16 %v394, %v394
    %v642 = vunpack.c.l.b16 %v424
    %v643 = vunpack.c.l.b16 %v425
    %v644 = vunpack.c.l.b16 %v426
    %v645 = vunpack.c.l.b16 %v427
    %v646 = vpack.c.b16 %v643, %v642
    %v647 = vpack.c.b16 %v645, %v644
    %v651 = vsel %vm442, %v637, 0
    %653 = vmatpush.bf16.msra.mxu0 0
    %654 = vmatpush.bf16.msra.mxu0 0
    %655 = vmatpush.bf16.msra.mxu0 0
    %656 = vmatpush.bf16.msra.mxu0 0
    %657 = vmatpush.bf16.msra.mxu0 0
    %658 = vmatpush.bf16.msra.mxu0 0
    %659 = vmatpush.bf16.msra.mxu0 %v647
    %660 = vmatpush.bf16.msra.mxu0 %v646
    %661 = vmatmul.bf16.gmra.mxu0 %v651
    %v662 = vpop.f32.mrf.mxu0
    %v663 = vadd.f32 0.0, %v662
    %v664 = vpop.f32.mrf.mxu0
    %665 = vdwg.mxu0
    %v666 = vadd.f32 %v636, %v663
    %v667 = vld [vmem:[%s7] sm:$0x1]
    %v669 = vperm.slane %v667, 0
    %v671 = vadd.f32 %v666, %v669
    %v672 = vtanh.pop %v671
    %vm673 = vcmask 130048
    %674 = vst.msk [vmem:[#allocation3] sm:$0xff] %vm673, %v672
    %v675 = vld [vmem:[%s8] sm:$0xf]
    %v676 = vld [vmem:[%s8 + $0x4] sm:$0xf]
    %v677 = vld [vmem:[%s8 + $0x8] sm:$0xf]
    %v678 = vld [vmem:[%s8 + $0xc] sm:$0xf]
    %v679 = vld [vmem:[%s8 + $0x10] sm:$0xf]
    %v680 = vld [vmem:[%s8 + $0x14] sm:$0xf]
    %v681 = vld [vmem:[%s8 + $0x18] sm:$0xf]
    %v682 = vld [vmem:[%s8 + $0x1c] sm:$0xf]
    %v683 = vld [vmem:[%s8 + $0x20] sm:$0xf]
    %v684 = vld [vmem:[%s8 + $0x24] sm:$0xf]
    %v685 = vld [vmem:[%s8 + $0x28] sm:$0xf]
    %v686 = vld [vmem:[%s8 + $0x2c] sm:$0xf]
    %v687 = vld [vmem:[%s8 + $0x30] sm:$0xf]
    %v688 = vld [vmem:[%s8 + $0x34] sm:$0xf]
    %v689 = vld [vmem:[%s8 + $0x38] sm:$0xf]
    %v690 = vld [vmem:[%s8 + $0x3c] sm:$0xf]
    %v691 = vld [vmem:[%s9] sm:$0xff]
    %v692 = vpack.c.bf16 %v672, %v672
    %v693 = vperm.slane %v691, 0
    %v696 = vunpack.c.l.b16 %v675
    %v697 = vunpack.c.l.b16 %v676
    %v698 = vpack.c.b16 %v697, %v696
    %v701 = vsel %vm673, %v692, 0
    %703 = vmatpush.bf16.msra.mxu0 0
    %704 = vmatpush.bf16.msra.mxu0 0
    %705 = vmatpush.bf16.msra.mxu0 0
    %706 = vmatpush.bf16.msra.mxu0 0
    %707 = vmatpush.bf16.msra.mxu0 0
    %708 = vmatpush.bf16.msra.mxu0 0
    %709 = vmatpush.bf16.msra.mxu0 0
    %710 = vmatpush.bf16.msra.mxu0 %v698
    %711 = vmatmul.bf16.gmra.mxu0 %v701
    %v712 = vpop.f32.mrf.mxu0
    %v713 = vadd.f32 %v693, %v712
    %v714 = vpop.f32.mrf.mxu0
    %715 = vdwg.mxu0
    %716 = vst.msk [vmem:[#allocation2] sm:$0xff] %vm442, %v713
    %v717 = vperm.slane %v691, 1
    %v720 = vunpack.c.l.b16 %v677
    %v721 = vunpack.c.l.b16 %v678
    %v722 = vpack.c.b16 %v721, %v720
    %724 = vmatpush.bf16.msra.mxu0 0
    %725 = vmatpush.bf16.msra.mxu0 0
    %726 = vmatpush.bf16.msra.mxu0 0
    %727 = vmatpush.bf16.msra.mxu0 0
    %728 = vmatpush.bf16.msra.mxu0 0
    %729 = vmatpush.bf16.msra.mxu0 0
    %730 = vmatpush.bf16.msra.mxu0 0
    %731 = vmatpush.bf16.msra.mxu0 %v722
    %732 = vmatmul.bf16.gmra.mxu0 %v701
    %v733 = vpop.f32.mrf.mxu0
    %v734 = vadd.f32 %v717, %v733
    %v735 = vpop.f32.mrf.mxu0
    %736 = vdwg.mxu0
    %737 = vst.msk [vmem:[#allocation2 + $0x8] sm:$0xff] %vm442, %v734
    %v738 = vperm.slane %v691, 2
    %v741 = vunpack.c.l.b16 %v679
    %v742 = vunpack.c.l.b16 %v680
    %v743 = vpack.c.b16 %v742, %v741
    %745 = vmatpush.bf16.msra.mxu0 0
    %746 = vmatpush.bf16.msra.mxu0 0
    %747 = vmatpush.bf16.msra.mxu0 0
    %748 = vmatpush.bf16.msra.mxu0 0
    %749 = vmatpush.bf16.msra.mxu0 0
    %750 = vmatpush.bf16.msra.mxu0 0
    %751 = vmatpush.bf16.msra.mxu0 0
    %752 = vmatpush.bf16.msra.mxu0 %v743
    %753 = vmatmul.bf16.gmra.mxu0 %v701
    %v754 = vpop.f32.mrf.mxu0
    %v755 = vadd.f32 %v738, %v754
    %v756 = vpop.f32.mrf.mxu0
    %757 = vdwg.mxu0
    %758 = vst.msk [vmem:[#allocation2 + $0x10] sm:$0xff] %vm442, %v755
    %v759 = vperm.slane %v691, 3
    %v762 = vunpack.c.l.b16 %v681
    %v763 = vunpack.c.l.b16 %v682
    %v764 = vpack.c.b16 %v763, %v762
    %766 = vmatpush.bf16.msra.mxu0 0
    %767 = vmatpush.bf16.msra.mxu0 0
    %768 = vmatpush.bf16.msra.mxu0 0
    %769 = vmatpush.bf16.msra.mxu0 0
    %770 = vmatpush.bf16.msra.mxu0 0
    %771 = vmatpush.bf16.msra.mxu0 0
    %772 = vmatpush.bf16.msra.mxu0 0
    %773 = vmatpush.bf16.msra.mxu0 %v764
    %774 = vmatmul.bf16.gmra.mxu0 %v701
    %v775 = vpop.f32.mrf.mxu0
    %v776 = vadd.f32 %v759, %v775
    %v777 = vpop.f32.mrf.mxu0
    %778 = vdwg.mxu0
    %779 = vst.msk [vmem:[#allocation2 + $0x18] sm:$0xff] %vm442, %v776
    %v780 = vperm.slane %v691, 4
    %v783 = vunpack.c.l.b16 %v683
    %v784 = vunpack.c.l.b16 %v684
    %v785 = vpack.c.b16 %v784, %v783
    %787 = vmatpush.bf16.msra.mxu0 0
    %788 = vmatpush.bf16.msra.mxu0 0
    %789 = vmatpush.bf16.msra.mxu0 0
    %790 = vmatpush.bf16.msra.mxu0 0
    %791 = vmatpush.bf16.msra.mxu0 0
    %792 = vmatpush.bf16.msra.mxu0 0
    %793 = vmatpush.bf16.msra.mxu0 0
    %794 = vmatpush.bf16.msra.mxu0 %v785
    %795 = vmatmul.bf16.gmra.mxu0 %v701
    %v796 = vpop.f32.mrf.mxu0
    %v797 = vadd.f32 %v780, %v796
    %v798 = vpop.f32.mrf.mxu0
    %799 = vdwg.mxu0
    %800 = vst.msk [vmem:[#allocation2 + $0x20] sm:$0xff] %vm442, %v797
    %v801 = vperm.slane %v691, 5
    %v804 = vunpack.c.l.b16 %v685
    %v805 = vunpack.c.l.b16 %v686
    %v806 = vpack.c.b16 %v805, %v804
    %808 = vmatpush.bf16.msra.mxu0 0
    %809 = vmatpush.bf16.msra.mxu0 0
    %810 = vmatpush.bf16.msra.mxu0 0
    %811 = vmatpush.bf16.msra.mxu0 0
    %812 = vmatpush.bf16.msra.mxu0 0
    %813 = vmatpush.bf16.msra.mxu0 0
    %814 = vmatpush.bf16.msra.mxu0 0
    %815 = vmatpush.bf16.msra.mxu0 %v806
    %816 = vmatmul.bf16.gmra.mxu0 %v701
    %v817 = vpop.f32.mrf.mxu0
    %v818 = vadd.f32 %v801, %v817
    %v819 = vpop.f32.mrf.mxu0
    %820 = vdwg.mxu0
    %821 = vst.msk [vmem:[#allocation2 + $0x28] sm:$0xff] %vm442, %v818
    %v822 = vperm.slane %v691, 6
    %v825 = vunpack.c.l.b16 %v687
    %v826 = vunpack.c.l.b16 %v688
    %v827 = vpack.c.b16 %v826, %v825
    %829 = vmatpush.bf16.msra.mxu0 0
    %830 = vmatpush.bf16.msra.mxu0 0
    %831 = vmatpush.bf16.msra.mxu0 0
    %832 = vmatpush.bf16.msra.mxu0 0
    %833 = vmatpush.bf16.msra.mxu0 0
    %834 = vmatpush.bf16.msra.mxu0 0
    %835 = vmatpush.bf16.msra.mxu0 0
    %836 = vmatpush.bf16.msra.mxu0 %v827
    %837 = vmatmul.bf16.gmra.mxu0 %v701
    %v838 = vpop.f32.mrf.mxu0
    %v839 = vadd.f32 %v822, %v838
    %v840 = vpop.f32.mrf.mxu0
    %841 = vdwg.mxu0
    %842 = vst.msk [vmem:[#allocation2 + $0x30] sm:$0xff] %vm442, %v839
    %v843 = vperm.slane %v691, 7
    %v846 = vunpack.c.l.b16 %v689
    %v847 = vunpack.c.l.b16 %v690
    %v848 = vpack.c.b16 %v847, %v846
    %850 = vmatpush.bf16.msra.mxu0 0
    %851 = vmatpush.bf16.msra.mxu0 0
    %852 = vmatpush.bf16.msra.mxu0 0
    %853 = vmatpush.bf16.msra.mxu0 0
    %854 = vmatpush.bf16.msra.mxu0 0
    %855 = vmatpush.bf16.msra.mxu0 0
    %856 = vmatpush.bf16.msra.mxu0 0
    %857 = vmatpush.bf16.msra.mxu0 %v848
    %858 = vmatmul.bf16.gmra.mxu0 %v701
    %v859 = vpop.f32.mrf.mxu0
    %v860 = vadd.f32 %v843, %v859
    %v861 = vpop.f32.mrf.mxu0
    %862 = vdwg.mxu0
    %863 = vst.msk [vmem:[#allocation2 + $0x38] sm:$0xff] %vm442, %v860
    %v864 = vld [vmem:[#allocation2] sm:$0xff]
    %v865 = vld [vmem:[#allocation2 + $0x8] sm:$0xff]
    %v866 = vld [vmem:[#allocation2 + $0x10] sm:$0xff]
    %v867 = vld [vmem:[#allocation2 + $0x18] sm:$0xff]
    %v868 = vld [vmem:[#allocation2 + $0x20] sm:$0xff]
    %v869 = vld [vmem:[#allocation2 + $0x28] sm:$0xff]
    %v870 = vld [vmem:[#allocation2 + $0x30] sm:$0xff]
    %v871 = vld [vmem:[#allocation2 + $0x38] sm:$0xff]
    %v872 = vpack.c.bf16 %v865, %v864
    %v873 = vpack.c.bf16 %v867, %v866
    %v874 = vpack.c.bf16 %v869, %v868
    %v875 = vpack.c.bf16 %v871, %v870
    %v876 = vld [vmem:[%s10] sm:$0xf]
    %v877 = vld [vmem:[%s10 + $0x4] sm:$0xf]
    %v878 = vld [vmem:[%s10 + $0x8] sm:$0xf]
    %v879 = vld [vmem:[%s10 + $0xc] sm:$0xf]
    %v884 = vunpack.c.l.b16 %v876
    %v885 = vunpack.c.l.b16 %v877
    %v886 = vunpack.c.l.b16 %v878
    %v887 = vunpack.c.l.b16 %v879
    %v888 = vpack.c.b16 %v885, %v884
    %v889 = vpack.c.b16 %v887, %v886
    %v893 = vsel %vm442, %v872, 0
    %v896 = vsel %vm442, %v873, 0
    %v899 = vsel %vm442, %v874, 0
    %v902 = vsel %vm442, %v875, 0
    %904 = vmatpush.bf16.msra.mxu0 0
    %905 = vmatpush.bf16.msra.mxu0 0
    %906 = vmatpush.bf16.msra.mxu0 0
    %907 = vmatpush.bf16.msra.mxu0 0
    %908 = vmatpush.bf16.msra.mxu0 0
    %909 = vmatpush.bf16.msra.mxu0 0
    %910 = vmatpush.bf16.msra.mxu0 %v889
    %911 = vmatpush.bf16.msra.mxu0 %v888
    %912 = vmatmul.bf16.gmra.mxu0 %v893
    %v913 = vpop.f32.mrf.mxu0
    %v914 = vadd.f32 0.0, %v913
    %v915 = vpop.f32.mrf.mxu0
    %v916 = vadd.f32 0.0, %v915
    %917 = vmatmul.bf16.gmra.mxu0 %v896
    %v918 = vpop.f32.mrf.mxu0
    %v919 = vadd.f32 0.0, %v918
    %v920 = vpop.f32.mrf.mxu0
    %v921 = vadd.f32 0.0, %v920
    %922 = vmatmul.bf16.gmra.mxu0 %v899
    %v923 = vpop.f32.mrf.mxu0
    %v924 = vadd.f32 0.0, %v923
    %v925 = vpop.f32.mrf.mxu0
    %v926 = vadd.f32 0.0, %v925
    %927 = vmatmul.bf16.gmra.mxu0 %v902
    %v928 = vpop.f32.mrf.mxu0
    %v929 = vadd.f32 0.0, %v928
    %v930 = vpop.f32.mrf.mxu0
    %v931 = vadd.f32 0.0, %v930
    %932 = vdwg.mxu0
    %v933 = vld [vmem:[%s3] sm:$0xf]
    %v934 = vld [vmem:[%s3 + $0x4] sm:$0xf]
    %v935 = vld [vmem:[%s3 + $0x8] sm:$0xf]
    %v936 = vld [vmem:[%s3 + $0xc] sm:$0xf]
    %v937 = vld [vmem:[%s3 + $0x10] sm:$0xf]
    %v938 = vld [vmem:[%s3 + $0x14] sm:$0xf]
    %v939 = vld [vmem:[%s3 + $0x18] sm:$0xf]
    %v940 = vld [vmem:[%s3 + $0x1c] sm:$0xf]
    %v941 = vld [vmem:[%s3 + $0x20] sm:$0xf]
    %v942 = vld [vmem:[%s3 + $0x24] sm:$0xf]
    %v943 = vld [vmem:[%s3 + $0x28] sm:$0xf]
    %v944 = vld [vmem:[%s3 + $0x2c] sm:$0xf]
    %v945 = vld [vmem:[%s3 + $0x30] sm:$0xf]
    %v946 = vld [vmem:[%s3 + $0x34] sm:$0xf]
    %v947 = vld [vmem:[%s3 + $0x38] sm:$0xf]
    %v948 = vld [vmem:[%s3 + $0x3c] sm:$0xf]
    %v949 = vpack.c.bf16 %v916, %v914
    %v950 = vpack.c.bf16 %v921, %v919
    %v951 = vpack.c.bf16 %v926, %v924
    %v952 = vpack.c.bf16 %v931, %v929
    %v953 = vld [vmem:[%s11] sm:$0x1]
    %v955 = vperm.slane %v953, 0
    %v973 = vunpack.c.l.b16 %v933
    %v974 = vunpack.c.l.b16 %v934
    %v975 = vunpack.c.l.b16 %v935
    %v976 = vunpack.c.l.b16 %v936
    %v977 = vunpack.c.l.b16 %v937
    %v978 = vunpack.c.l.b16 %v938
    %v979 = vunpack.c.l.b16 %v939
    %v980 = vunpack.c.l.b16 %v940
    %v981 = vunpack.c.l.b16 %v941
    %v982 = vunpack.c.l.b16 %v942
    %v983 = vunpack.c.l.b16 %v943
    %v984 = vunpack.c.l.b16 %v944
    %v985 = vunpack.c.l.b16 %v945
    %v986 = vunpack.c.l.b16 %v946
    %v987 = vunpack.c.l.b16 %v947
    %v988 = vunpack.c.l.b16 %v948
    %v989 = vpack.c.b16 %v974, %v973
    %v990 = vpack.c.b16 %v976, %v975
    %v991 = vpack.c.b16 %v978, %v977
    %v992 = vpack.c.b16 %v980, %v979
    %v993 = vpack.c.b16 %v982, %v981
    %v994 = vpack.c.b16 %v984, %v983
    %v995 = vpack.c.b16 %v986, %v985
    %v996 = vpack.c.b16 %v988, %v987
    %vm997 = vcmask 523264
    %v999 = vsel %vm997, %v989, 0
    %v1002 = vsel %vm997, %v990, 0
    %v1005 = vsel %vm997, %v991, 0
    %v1008 = vsel %vm997, %v992, 0
    %v1011 = vsel %vm997, %v993, 0
    %v1014 = vsel %vm997, %v994, 0
    %v1017 = vsel %vm997, %v995, 0
    %v1020 = vsel %vm997, %v996, 0
    %1022 = vmatpush.bf16.msra.mxu0 0
    %1023 = vmatpush.bf16.msra.mxu0 0
    %1024 = vmatpush.bf16.msra.mxu0 0
    %1025 = vmatpush.bf16.msra.mxu0 0
    %1026 = vmatpush.bf16.msra.mxu0 %v952
    %1027 = vmatpush.bf16.msra.mxu0 %v951
    %1028 = vmatpush.bf16.msra.mxu0 %v950
    %1029 = vmatpush.bf16.msra.mxu0 %v949
    %1030 = vmatmul.bf16.gmra.mxu0 %v999
    %v1031 = vpop.f32.mrf.mxu0
    %v1032 = vadd.f32 %v955, %v1031
    %v1033 = vpop.f32.mrf.mxu0
    %v1034 = vadd.f32 %v955, %v1033
    %1035 = vmatmul.bf16.gmra.mxu0 %v1002
    %v1036 = vpop.f32.mrf.mxu0
    %v1037 = vadd.f32 %v955, %v1036
    %v1038 = vpop.f32.mrf.mxu0
    %v1039 = vadd.f32 %v955, %v1038
    %1040 = vmatmul.bf16.gmra.mxu0 %v1005
    %v1041 = vpop.f32.mrf.mxu0
    %v1042 = vadd.f32 %v955, %v1041
    %v1043 = vpop.f32.mrf.mxu0
    %v1044 = vadd.f32 %v955, %v1043
    %1045 = vmatmul.bf16.gmra.mxu0 %v1008
    %v1046 = vpop.f32.mrf.mxu0
    %v1047 = vadd.f32 %v955, %v1046
    %v1048 = vpop.f32.mrf.mxu0
    %v1049 = vadd.f32 %v955, %v1048
    %1050 = vmatmul.bf16.gmra.mxu0 %v1011
    %v1051 = vpop.f32.mrf.mxu0
    %v1052 = vadd.f32 %v955, %v1051
    %v1053 = vpop.f32.mrf.mxu0
    %v1054 = vadd.f32 %v955, %v1053
    %1055 = vmatmul.bf16.gmra.mxu0 %v1014
    %v1056 = vpop.f32.mrf.mxu0
    %v1057 = vadd.f32 %v955, %v1056
    %v1058 = vpop.f32.mrf.mxu0
    %v1059 = vadd.f32 %v955, %v1058
    %1060 = vmatmul.bf16.gmra.mxu0 %v1017
    %v1061 = vpop.f32.mrf.mxu0
    %v1062 = vadd.f32 %v955, %v1061
    %v1063 = vpop.f32.mrf.mxu0
    %v1064 = vadd.f32 %v955, %v1063
    %1065 = vmatmul.bf16.gmra.mxu0 %v1020
    %v1066 = vpop.f32.mrf.mxu0
    %v1067 = vadd.f32 %v955, %v1066
    %v1068 = vpop.f32.mrf.mxu0
    %v1069 = vadd.f32 %v955, %v1068
    %1070 = vdwg.mxu0
    %v1071 = vmax.f32 %v1032, 0.0
    %v1072 = vmax.f32 %v1034, 0.0
    %v1073 = vmax.f32 %v1037, 0.0
    %v1074 = vmax.f32 %v1039, 0.0
    %v1075 = vmax.f32 %v1042, 0.0
    %v1076 = vmax.f32 %v1044, 0.0
    %v1077 = vmax.f32 %v1047, 0.0
    %v1078 = vmax.f32 %v1049, 0.0
    %v1079 = vmax.f32 %v1052, 0.0
    %v1080 = vmax.f32 %v1054, 0.0
    %v1081 = vmax.f32 %v1057, 0.0
    %v1082 = vmax.f32 %v1059, 0.0
    %v1083 = vmax.f32 %v1062, 0.0
    %v1084 = vmax.f32 %v1064, 0.0
    %v1085 = vmax.f32 %v1067, 0.0
    %v1086 = vmax.f32 %v1069, 0.0
    %v1087 = vld [vmem:[%s12] sm:$0xf]
    %v1089 = vsel %vm133, %v1087, 0
    %1091 = vmatpush.bf16.msra.mxu0 0
    %1092 = vmatpush.bf16.msra.mxu0 0
    %1093 = vmatpush.bf16.msra.mxu0 0
    %1094 = vmatpush.bf16.msra.mxu0 0
    %1095 = vmatpush.bf16.msra.mxu0 0
    %1096 = vmatpush.bf16.msra.mxu0 0
    %1097 = vmatpush.bf16.msra.mxu0 0
    %1098 = vmatpush.bf16.msra.mxu0 %v1089
    %1099 = vmatmul.bf16.gmra.mxu0 %v110
    %v1100 = vpop.f32.mrf.mxu0
    %v1101 = vadd.f32 0.0, %v1100
    %v1102 = vpop.f32.mrf.mxu0
    %v1103 = vadd.f32 0.0, %v1102
    %1104 = vmatmul.bf16.gmra.mxu0 %v113
    %v1105 = vpop.f32.mrf.mxu0
    %v1106 = vadd.f32 0.0, %v1105
    %v1107 = vpop.f32.mrf.mxu0
    %v1108 = vadd.f32 0.0, %v1107
    %1109 = vmatmul.bf16.gmra.mxu0 %v116
    %v1110 = vpop.f32.mrf.mxu0
    %v1111 = vadd.f32 0.0, %v1110
    %v1112 = vpop.f32.mrf.mxu0
    %v1113 = vadd.f32 0.0, %v1112
    %1114 = vmatmul.bf16.gmra.mxu0 %v119
    %v1115 = vpop.f32.mrf.mxu0
    %v1116 = vadd.f32 0.0, %v1115
    %v1117 = vpop.f32.mrf.mxu0
    %v1118 = vadd.f32 0.0, %v1117
    %1119 = vmatmul.bf16.gmra.mxu0 %v122
    %v1120 = vpop.f32.mrf.mxu0
    %v1121 = vadd.f32 0.0, %v1120
    %v1122 = vpop.f32.mrf.mxu0
    %v1123 = vadd.f32 0.0, %v1122
    %1124 = vmatmul.bf16.gmra.mxu0 %v125
    %v1125 = vpop.f32.mrf.mxu0
    %v1126 = vadd.f32 0.0, %v1125
    %v1127 = vpop.f32.mrf.mxu0
    %v1128 = vadd.f32 0.0, %v1127
    %1129 = vmatmul.bf16.gmra.mxu0 %v128
    %v1130 = vpop.f32.mrf.mxu0
    %v1131 = vadd.f32 0.0, %v1130
    %v1132 = vpop.f32.mrf.mxu0
    %v1133 = vadd.f32 0.0, %v1132
    %1134 = vmatmul.bf16.gmra.mxu0 %v131
    %v1135 = vpop.f32.mrf.mxu0
    %v1136 = vadd.f32 0.0, %v1135
    %v1137 = vpop.f32.mrf.mxu0
    %v1138 = vadd.f32 0.0, %v1137
    %1139 = vdwg.mxu0
    %v1140 = vadd.f32 %v1071, %v1101
    %v1141 = vadd.f32 %v1072, %v1103
    %v1142 = vadd.f32 %v1073, %v1106
    %v1143 = vadd.f32 %v1074, %v1108
    %v1144 = vadd.f32 %v1075, %v1111
    %v1145 = vadd.f32 %v1076, %v1113
    %v1146 = vadd.f32 %v1077, %v1116
    %v1147 = vadd.f32 %v1078, %v1118
    %v1148 = vadd.f32 %v1079, %v1121
    %v1149 = vadd.f32 %v1080, %v1123
    %v1150 = vadd.f32 %v1081, %v1126
    %v1151 = vadd.f32 %v1082, %v1128
    %v1152 = vadd.f32 %v1083, %v1131
    %v1153 = vadd.f32 %v1084, %v1133
    %v1154 = vadd.f32 %v1085, %v1136
    %v1155 = vadd.f32 %v1086, %v1138
    %v1156 = vld [vmem:[%s13] sm:$0x1]
    %v1158 = vperm.slane %v1156, 0
    %v1160 = vadd.f32 %v1140, %v1158
    %v1161 = vadd.f32 %v1141, %v1158
    %v1162 = vadd.f32 %v1142, %v1158
    %v1163 = vadd.f32 %v1143, %v1158
    %v1164 = vadd.f32 %v1144, %v1158
    %v1165 = vadd.f32 %v1145, %v1158
    %v1166 = vadd.f32 %v1146, %v1158
    %v1167 = vadd.f32 %v1147, %v1158
    %v1168 = vadd.f32 %v1148, %v1158
    %v1169 = vadd.f32 %v1149, %v1158
    %v1170 = vadd.f32 %v1150, %v1158
    %v1171 = vadd.f32 %v1151, %v1158
    %v1172 = vadd.f32 %v1152, %v1158
    %v1173 = vadd.f32 %v1153, %v1158
    %v1174 = vadd.f32 %v1154, %v1158
    %v1175 = vadd.f32 %v1155, %v1158
    %1176 = vst.msk [vmem:[%s14] sm:$0xff] %vm673, %v1160
    %1177 = vst.msk [vmem:[%s14 + $0x8] sm:$0xff] %vm673, %v1161
    %1178 = vst.msk [vmem:[%s14 + $0x10] sm:$0xff] %vm673, %v1162
    %1179 = vst.msk [vmem:[%s14 + $0x18] sm:$0xff] %vm673, %v1163
    %1180 = vst.msk [vmem:[%s14 + $0x20] sm:$0xff] %vm673, %v1164
    %1181 = vst.msk [vmem:[%s14 + $0x28] sm:$0xff] %vm673, %v1165
    %1182 = vst.msk [vmem:[%s14 + $0x30] sm:$0xff] %vm673, %v1166
    %1183 = vst.msk [vmem:[%s14 + $0x38] sm:$0xff] %vm673, %v1167
    %1184 = vst.msk [vmem:[%s14 + $0x40] sm:$0xff] %vm673, %v1168
    %1185 = vst.msk [vmem:[%s14 + $0x48] sm:$0xff] %vm673, %v1169
    %1186 = vst.msk [vmem:[%s14 + $0x50] sm:$0xff] %vm673, %v1170
    %1187 = vst.msk [vmem:[%s14 + $0x58] sm:$0xff] %vm673, %v1171
    %1188 = vst.msk [vmem:[%s14 + $0x60] sm:$0xff] %vm673, %v1172
    %1189 = vst.msk [vmem:[%s14 + $0x68] sm:$0xff] %vm673, %v1173
    %1190 = vst.msk [vmem:[%s14 + $0x70] sm:$0xff] %vm673, %v1174
    %1191 = vst.msk [vmem:[%s14 + $0x78] sm:$0xff] %vm673, %v1175
    // Predicated region
    $region58: #{tpu_custom_call.1} parent=1 // pred_check
      _
    $region59: #{tpu_custom_call.1} parent=1 // pred_check_branch
      %1193 = sbr.rel (0) target = $region61
    $region60: #{tpu_custom_call.1} parent=1 // pred_region
      _
    $region61: #{tpu_custom_call.1} parent=1 // pred_fallthru
      _
    // Predicated region
    $region62: #{tpu_custom_call.1} parent=1 // pred_check
      _
    $region63: #{tpu_custom_call.1} parent=1 // pred_check_branch
      %1195 = sbr.rel (0) target = $region65
    $region64: #{tpu_custom_call.1} parent=1 // pred_region
      %1197 = vsyncadd [#allocation4], 0
      %s1199 = sshll.u32 [#allocation3], 4
      %s1200 = int_to_ptr.vmem [resolvable:$true] %s1199
      %s1201 = sshll.u32 %s15, 4
      %s1202 = int_to_ptr.hbm [resolvable:$true] %s1201
      %1204 = dma.vmem_to_hbm [thread:$0]  %s1200, 128, %s1202, [#allocation4]
    $region65: #{tpu_custom_call.1} parent=1 // pred_fallthru
      _
    // Predicated region
    $region66: #{tpu_custom_call.1} parent=1 // pred_check
      _
    $region67: #{tpu_custom_call.1} parent=1 // pred_check_branch
      %1206 = sbr.rel (0) target = $region69
    $region68: #{tpu_custom_call.1} parent=1 // pred_region
      _
    $region69: #{tpu_custom_call.1} parent=1 // pred_fallthru
      _
    // Predicated region
    $region70: #{tpu_custom_call.1} parent=1 // pred_check
      _
    $region71: #{tpu_custom_call.1} parent=1 // pred_check_branch
      %1208 = sbr.rel (0) target = $region73
    $region72: #{tpu_custom_call.1} parent=1 // pred_region
      %1210 = dma.done [#allocation4], 128
    $region73: #{tpu_custom_call.1} parent=1 // pred_fallthru
      _
    %1211 = vsyncpa [#allocation4], 1

</llo_original>
